<compile_context>
chip_gen: v6e
topology: v6e:2x2x1
jax: 0.10.0
libtpu: 0.0.40
codegen_flags: <defaults>
</compile_context>

<pallas_src>
import jax
import jax.numpy as jnp
from jax.experimental import pallas as pl
from jax.experimental.pallas import tpu as pltpu

EPS = 1e-5


def _round_up(n, m):
    return ((n + m - 1) // m) * m


def _row_norm_relu(h):
    """InstanceNorm1d-on-2D-input semantics (per-row normalize, biased var) + ReLU.

    Done entirely in float32 regardless of matmul operand dtype."""
    mu = jnp.mean(h, axis=-1, keepdims=True)
    var = jnp.mean((h - mu) * (h - mu), axis=-1, keepdims=True)
    hn = (h - mu) * jax.lax.rsqrt(var + EPS)
    return jnp.maximum(hn, 0.0)


def _classifier_kernel(x_ref, w1_ref, w11_ref, w12_ref, wred_ref, w2_ref, y_ref):
    # x_ref: (TB, 192) bf16; weights bf16 (in, out); accumulation + norms in f32.
    h = jnp.dot(x_ref[...], w1_ref[...], preferred_element_type=jnp.float32)   # (TB, 512)
    h = _row_norm_relu(h).astype(jnp.bfloat16)                                 # bn1 + relu1

    h = jnp.dot(h, w11_ref[...], preferred_element_type=jnp.float32)           # (TB, 256)
    h = _row_norm_relu(h).astype(jnp.bfloat16)                                 # bn1_1 + relu1_1

    h = jnp.dot(h, w12_ref[...], preferred_element_type=jnp.float32)           # (TB, 256)
    h = _row_norm_relu(h).astype(jnp.bfloat16)                                 # bn1_2 + relu1_2

    feat = jnp.dot(h, wred_ref[...], preferred_element_type=jnp.float32)       # (TB, 192)
    feat = feat.astype(jnp.bfloat16)

    # fc2 with lane-dense padded N (zero columns sliced off outside the kernel)
    y_ref[...] = jnp.dot(feat, w2_ref[...], preferred_element_type=jnp.float32)


def prepare_params(params):
    """One-time weight prep (hoisted out of the forward call):
    transpose PyTorch (out, in) -> (in, out), zero-pad fc2 columns to a
    lane-dense multiple of 128, cast everything to bfloat16."""
    num_classes = params["fc2"].shape[0]
    c_pad = _round_up(max(num_classes, 128), 128)
    w2 = params["fc2"].T                                   # (192, num_classes)
    w2 = jnp.pad(w2, ((0, 0), (0, c_pad - num_classes)))   # (192, c_pad)
    return {
        "w1": params["fc1"].T.astype(jnp.bfloat16),        # (192, 512)
        "w11": params["fc1_1"].T.astype(jnp.bfloat16),     # (512, 256)
        "w12": params["fc1_2"].T.astype(jnp.bfloat16),     # (256, 256)
        "wred": params["reducedim"].T.astype(jnp.bfloat16),# (256, 192)
        "w2": w2.astype(jnp.bfloat16),                     # (192, c_pad)
        "num_classes": num_classes,                        # python int
    }


def classifier_spk_eresnet_forward(x, prepared, *, block_b=128):
    """Forward pass. `prepared` comes from prepare_params (called once)."""
    num_classes = prepared["num_classes"]
    w1, w11, w12 = prepared["w1"], prepared["w11"], prepared["w12"]
    wred, w2 = prepared["wred"], prepared["w2"]
    c_pad = w2.shape[1]

    # torch: if len(x.shape) < 2: x = x.unsqueeze(0); x = torch.flatten(x, 1)
    if x.ndim < 2:
        x = x[None, :]
    x = x.reshape(x.shape[0], -1)
    B, in_dim = x.shape

    # Batch tiling: sublane-aligned tile, batch padded to a tile multiple.
    tb = min(block_b, _round_up(B, 8))
    b_pad = _round_up(B, tb)
    if b_pad != B:
        x = jnp.pad(x, ((0, b_pad - B), (0, 0)))
    x = x.astype(jnp.bfloat16)

    grid = (b_pad // tb,)

    def weight_spec(w):
        return pl.BlockSpec(w.shape, lambda i: (0, 0))

    flops = 2 * b_pad * (in_dim * 512 + 512 * 256 + 256 * 256 + 256 * 192 + 192 * c_pad)
    bytes_accessed = 2 * (x.size + w1.size + w11.size + w12.size + wred.size + w2.size) \
        + 4 * b_pad * c_pad

    y = pl.pallas_call(
        _classifier_kernel,
        out_shape=jax.ShapeDtypeStruct((b_pad, c_pad), jnp.float32),
        grid_spec=pl.GridSpec(
            grid=grid,
            in_specs=[
                pl.BlockSpec((tb, in_dim), lambda i: (i, 0)),
                weight_spec(w1),
                weight_spec(w11),
                weight_spec(w12),
                weight_spec(wred),
                weight_spec(w2),
            ],
            out_specs=pl.BlockSpec((tb, c_pad), lambda i: (i, 0)),
        ),
        compiler_params=pltpu.CompilerParams(
            dimension_semantics=("parallel",)),
        cost_estimate=pl.CostEstimate(
            flops=flops,
            transcendentals=3 * b_pad,
            bytes_accessed=bytes_accessed),
    )(x, w1, w11, w12, wred, w2)

    # Drop batch padding and the zero logit columns outside the kernel.
    return y[:B, :num_classes]


def _reference_forward_f32(x, params):
    """Pure float32 reference with original PyTorch semantics."""
    x = x.reshape(x.shape[0], -1).astype(jnp.float32)

    def norm_relu(h):
        mu = jnp.mean(h, axis=-1, keepdims=True)
        var = jnp.mean((h - mu) ** 2, axis=-1, keepdims=True)
        return jnp.maximum((h - mu) / jnp.sqrt(var + EPS), 0.0)

    h = norm_relu(x @ params["fc1"].T)
    h = norm_relu(h @ params["fc1_1"].T)
    h = norm_relu(h @ params["fc1_2"].T)
    feat = h @ params["reducedim"].T
    return feat @ params["fc2"].T


def _reference_forward_bf16(x, prepared):
    """Reference mirroring the kernel numerics: bf16 matmul operands,
    f32 accumulation, f32 normalization."""
    num_classes = prepared["num_classes"]
    x = x.reshape(x.shape[0], -1)

    def dot(a, b):
        return jnp.dot(a.astype(jnp.bfloat16), b, preferred_element_type=jnp.float32)

    def norm_relu(h):
        mu = jnp.mean(h, axis=-1, keepdims=True)
        var = jnp.mean((h - mu) ** 2, axis=-1, keepdims=True)
        return jnp.maximum((h - mu) * jax.lax.rsqrt(var + EPS), 0.0)

    h = norm_relu(dot(x, prepared["w1"]))
    h = norm_relu(dot(h, prepared["w11"]))
    h = norm_relu(dot(h, prepared["w12"]))
    feat = dot(h, prepared["wred"])
    y = dot(feat, prepared["w2"])
    return y[:, :num_classes]


def init_params(key, num_classes):
    """Deterministic synthetic weights matching the module's __init__ shapes."""
    ks = jax.random.split(key, 5)
    mk = lambda k, o, i: (jax.random.normal(k, (o, i), jnp.float32) / jnp.sqrt(i))
    return {
        "fc1": mk(ks[0], 512, 192),
        "fc1_1": mk(ks[1], 256, 512),
        "fc1_2": mk(ks[2], 256, 256),
        "reducedim": mk(ks[3], 192, 256),
        "fc2": mk(ks[4], num_classes, 192),
    }


if __name__ == "__main__":
    key = jax.random.PRNGKey(0)
    k_x, k_p = jax.random.split(key)

    B, IN_DIM, NUM_CLASSES = 8, 192, 16
    x = jax.random.normal(k_x, (B, IN_DIM), jnp.float32)
    params = init_params(k_p, NUM_CLASSES)

    prepared = prepare_params(params)  # one-time: transpose + pad + bf16 cast

    y = classifier_spk_eresnet_forward(x, prepared)
    y = jax.block_until_ready(y)
    assert y.shape == (B, NUM_CLASSES)

    # Tight check against a reference that mirrors the kernel's bf16/f32 numerics.
    y_bf16_ref = _reference_forward_bf16(x, prepared)
    assert jnp.allclose(y, y_bf16_ref, atol=1e-3, rtol=1e-3), \
        "mismatch vs bf16-mirror reference"

    # Looser sanity check against the pure-f32 PyTorch-semantics reference
    # (bf16 operand rounding bounds the deviation).
    y_f32_ref = _reference_forward_f32(x, params)
    assert jnp.max(jnp.abs(y - y_f32_ref)) < 0.1, "too far from f32 reference"

    print("KERNEL_OK")
</pallas_src>

<mosaic_0001>
module attributes {stable_mosaic.version = 11 : i64} {
  func.func @_classifier_kernel(%arg0: i32, %arg1: memref<8x192xbf16, #tpu.memory_space<vmem>>, %arg2: memref<192x512xbf16, #tpu.memory_space<vmem>>, %arg3: memref<512x256xbf16, #tpu.memory_space<vmem>>, %arg4: memref<256x256xbf16, #tpu.memory_space<vmem>>, %arg5: memref<256x192xbf16, #tpu.memory_space<vmem>>, %arg6: memref<192x128xbf16, #tpu.memory_space<vmem>>, %arg7: memref<8x128xf32, #tpu.memory_space<vmem>>) attributes {dimension_semantics = [#tpu.dimension_semantics<parallel>], iteration_bounds = array<i64: 1>, scalar_prefetch = 0 : i64, scratch_operands = 0 : i64, tpu.core_type = #tpu.core_type<tc>, window_params = [{transform_indices = @transform_0, window_bounds = array<i64: 8, 192>}, {pipeline_mode = #tpu.pipeline_mode<synchronous>, transform_indices = @transform_1, window_bounds = array<i64: 192, 512>}, {pipeline_mode = #tpu.pipeline_mode<synchronous>, transform_indices = @transform_2, window_bounds = array<i64: 512, 256>}, {pipeline_mode = #tpu.pipeline_mode<synchronous>, transform_indices = @transform_3, window_bounds = array<i64: 256, 256>}, {pipeline_mode = #tpu.pipeline_mode<synchronous>, transform_indices = @transform_4, window_bounds = array<i64: 256, 192>}, {pipeline_mode = #tpu.pipeline_mode<synchronous>, transform_indices = @transform_5, window_bounds = array<i64: 192, 128>}, {transform_indices = @transform_6, window_bounds = array<i64: 8, 128>}]} {
    %c0 = arith.constant 0 : index
    %c0_0 = arith.constant 0 : index
    %0 = vector.load %arg1[%c0, %c0_0] : memref<8x192xbf16, #tpu.memory_space<vmem>>, vector<8x192xbf16>
    %c0_1 = arith.constant 0 : index
    %c0_2 = arith.constant 0 : index
    %1 = vector.load %arg2[%c0_1, %c0_2] : memref<192x512xbf16, #tpu.memory_space<vmem>>, vector<192x512xbf16>
    %cst = arith.constant dense<0.000000e+00> : vector<8x512xf32>
    %2 = tpu.matmul %0, %1, %cst {dimension_numbers = #tpu.dot_dimension_numbers<[1], [0], [0], [1], [0, 0, 1, 1], [], []>} : vector<8x192xbf16>, vector<192x512xbf16>, vector<8x512xf32> -> vector<8x512xf32>
    %cst_3 = arith.constant dense<0.000000e+00> : vector<8xf32>
    %3 = vector.multi_reduction <add>, %2, %cst_3 [1] : vector<8x512xf32> to vector<8xf32>
    %4 = vector.shape_cast %3 : vector<8xf32> to vector<8x1xf32>
    %cst_4 = arith.constant 5.120000e+02 : f32
    %5 = vector.broadcast %cst_4 : f32 to vector<8x1xf32>
    %6 = arith.divf %4, %5 : vector<8x1xf32>
    %7 = vector.broadcast %6 : vector<8x1xf32> to vector<8x512xf32>
    %8 = arith.subf %2, %7 : vector<8x512xf32>
    %9 = vector.broadcast %6 : vector<8x1xf32> to vector<8x512xf32>
    %10 = arith.subf %2, %9 : vector<8x512xf32>
    %11 = arith.mulf %8, %10 : vector<8x512xf32>
    %cst_5 = arith.constant dense<0.000000e+00> : vector<8xf32>
    %12 = vector.multi_reduction <add>, %11, %cst_5 [1] : vector<8x512xf32> to vector<8xf32>
    %13 = vector.shape_cast %12 : vector<8xf32> to vector<8x1xf32>
    %cst_6 = arith.constant 5.120000e+02 : f32
    %14 = vector.broadcast %cst_6 : f32 to vector<8x1xf32>
    %15 = arith.divf %13, %14 : vector<8x1xf32>
    %16 = vector.broadcast %6 : vector<8x1xf32> to vector<8x512xf32>
    %17 = arith.subf %2, %16 : vector<8x512xf32>
    %cst_7 = arith.constant 9.99999974E-6 : f32
    %18 = vector.broadcast %cst_7 : f32 to vector<8x1xf32>
    %19 = arith.addf %15, %18 : vector<8x1xf32>
    %20 = math.rsqrt %19 : vector<8x1xf32>
    %21 = vector.broadcast %20 : vector<8x1xf32> to vector<8x512xf32>
    %22 = arith.mulf %17, %21 : vector<8x512xf32>
    %cst_8 = arith.constant 0.000000e+00 : f32
    %23 = vector.broadcast %cst_8 : f32 to vector<8x512xf32>
    %24 = arith.maximumf %22, %23 : vector<8x512xf32>
    %25 = arith.truncf %24 : vector<8x512xf32> to vector<8x512xbf16>
    %c0_9 = arith.constant 0 : index
    %c0_10 = arith.constant 0 : index
    %26 = vector.load %arg3[%c0_9, %c0_10] : memref<512x256xbf16, #tpu.memory_space<vmem>>, vector<512x256xbf16>
    %cst_11 = arith.constant dense<0.000000e+00> : vector<8x256xf32>
    %27 = tpu.matmul %25, %26, %cst_11 {dimension_numbers = #tpu.dot_dimension_numbers<[1], [0], [0], [1], [0, 0, 1, 1], [], []>} : vector<8x512xbf16>, vector<512x256xbf16>, vector<8x256xf32> -> vector<8x256xf32>
    %cst_12 = arith.constant dense<0.000000e+00> : vector<8xf32>
    %28 = vector.multi_reduction <add>, %27, %cst_12 [1] : vector<8x256xf32> to vector<8xf32>
    %29 = vector.shape_cast %28 : vector<8xf32> to vector<8x1xf32>
    %cst_13 = arith.constant 2.560000e+02 : f32
    %30 = vector.broadcast %cst_13 : f32 to vector<8x1xf32>
    %31 = arith.divf %29, %30 : vector<8x1xf32>
    %32 = vector.broadcast %31 : vector<8x1xf32> to vector<8x256xf32>
    %33 = arith.subf %27, %32 : vector<8x256xf32>
    %34 = vector.broadcast %31 : vector<8x1xf32> to vector<8x256xf32>
    %35 = arith.subf %27, %34 : vector<8x256xf32>
    %36 = arith.mulf %33, %35 : vector<8x256xf32>
    %cst_14 = arith.constant dense<0.000000e+00> : vector<8xf32>
    %37 = vector.multi_reduction <add>, %36, %cst_14 [1] : vector<8x256xf32> to vector<8xf32>
    %38 = vector.shape_cast %37 : vector<8xf32> to vector<8x1xf32>
    %cst_15 = arith.constant 2.560000e+02 : f32
    %39 = vector.broadcast %cst_15 : f32 to vector<8x1xf32>
    %40 = arith.divf %38, %39 : vector<8x1xf32>
    %41 = vector.broadcast %31 : vector<8x1xf32> to vector<8x256xf32>
    %42 = arith.subf %27, %41 : vector<8x256xf32>
    %cst_16 = arith.constant 9.99999974E-6 : f32
    %43 = vector.broadcast %cst_16 : f32 to vector<8x1xf32>
    %44 = arith.addf %40, %43 : vector<8x1xf32>
    %45 = math.rsqrt %44 : vector<8x1xf32>
    %46 = vector.broadcast %45 : vector<8x1xf32> to vector<8x256xf32>
    %47 = arith.mulf %42, %46 : vector<8x256xf32>
    %cst_17 = arith.constant 0.000000e+00 : f32
    %48 = vector.broadcast %cst_17 : f32 to vector<8x256xf32>
    %49 = arith.maximumf %47, %48 : vector<8x256xf32>
    %50 = arith.truncf %49 : vector<8x256xf32> to vector<8x256xbf16>
    %c0_18 = arith.constant 0 : index
    %c0_19 = arith.constant 0 : index
    %51 = vector.load %arg4[%c0_18, %c0_19] : memref<256x256xbf16, #tpu.memory_space<vmem>>, vector<256x256xbf16>
    %cst_20 = arith.constant dense<0.000000e+00> : vector<8x256xf32>
    %52 = tpu.matmul %50, %51, %cst_20 {dimension_numbers = #tpu.dot_dimension_numbers<[1], [0], [0], [1], [0, 0, 1, 1], [], []>} : vector<8x256xbf16>, vector<256x256xbf16>, vector<8x256xf32> -> vector<8x256xf32>
    %cst_21 = arith.constant dense<0.000000e+00> : vector<8xf32>
    %53 = vector.multi_reduction <add>, %52, %cst_21 [1] : vector<8x256xf32> to vector<8xf32>
    %54 = vector.shape_cast %53 : vector<8xf32> to vector<8x1xf32>
    %cst_22 = arith.constant 2.560000e+02 : f32
    %55 = vector.broadcast %cst_22 : f32 to vector<8x1xf32>
    %56 = arith.divf %54, %55 : vector<8x1xf32>
    %57 = vector.broadcast %56 : vector<8x1xf32> to vector<8x256xf32>
    %58 = arith.subf %52, %57 : vector<8x256xf32>
    %59 = vector.broadcast %56 : vector<8x1xf32> to vector<8x256xf32>
    %60 = arith.subf %52, %59 : vector<8x256xf32>
    %61 = arith.mulf %58, %60 : vector<8x256xf32>
    %cst_23 = arith.constant dense<0.000000e+00> : vector<8xf32>
    %62 = vector.multi_reduction <add>, %61, %cst_23 [1] : vector<8x256xf32> to vector<8xf32>
    %63 = vector.shape_cast %62 : vector<8xf32> to vector<8x1xf32>
    %cst_24 = arith.constant 2.560000e+02 : f32
    %64 = vector.broadcast %cst_24 : f32 to vector<8x1xf32>
    %65 = arith.divf %63, %64 : vector<8x1xf32>
    %66 = vector.broadcast %56 : vector<8x1xf32> to vector<8x256xf32>
    %67 = arith.subf %52, %66 : vector<8x256xf32>
    %cst_25 = arith.constant 9.99999974E-6 : f32
    %68 = vector.broadcast %cst_25 : f32 to vector<8x1xf32>
    %69 = arith.addf %65, %68 : vector<8x1xf32>
    %70 = math.rsqrt %69 : vector<8x1xf32>
    %71 = vector.broadcast %70 : vector<8x1xf32> to vector<8x256xf32>
    %72 = arith.mulf %67, %71 : vector<8x256xf32>
    %cst_26 = arith.constant 0.000000e+00 : f32
    %73 = vector.broadcast %cst_26 : f32 to vector<8x256xf32>
    %74 = arith.maximumf %72, %73 : vector<8x256xf32>
    %75 = arith.truncf %74 : vector<8x256xf32> to vector<8x256xbf16>
    %c0_27 = arith.constant 0 : index
    %c0_28 = arith.constant 0 : index
    %76 = vector.load %arg5[%c0_27, %c0_28] : memref<256x192xbf16, #tpu.memory_space<vmem>>, vector<256x192xbf16>
    %cst_29 = arith.constant dense<0.000000e+00> : vector<8x192xf32>
    %77 = tpu.matmul %75, %76, %cst_29 {dimension_numbers = #tpu.dot_dimension_numbers<[1], [0], [0], [1], [0, 0, 1, 1], [], []>} : vector<8x256xbf16>, vector<256x192xbf16>, vector<8x192xf32> -> vector<8x192xf32>
    %78 = arith.truncf %77 : vector<8x192xf32> to vector<8x192xbf16>
    %c0_30 = arith.constant 0 : index
    %c0_31 = arith.constant 0 : index
    %79 = vector.load %arg6[%c0_30, %c0_31] : memref<192x128xbf16, #tpu.memory_space<vmem>>, vector<192x128xbf16>
    %cst_32 = arith.constant dense<0.000000e+00> : vector<8x128xf32>
    %80 = tpu.matmul %78, %79, %cst_32 {dimension_numbers = #tpu.dot_dimension_numbers<[1], [0], [0], [1], [0, 0, 1, 1], [], []>} : vector<8x192xbf16>, vector<192x128xbf16>, vector<8x128xf32> -> vector<8x128xf32>
    %c0_33 = arith.constant 0 : index
    %c0_34 = arith.constant 0 : index
    %81 = vector.load %arg7[%c0_33, %c0_34] : memref<8x128xf32, #tpu.memory_space<vmem>>, vector<8x128xf32>
    tpu.vector_store %arg7[%c0_33, %c0_34], %80 {strides = array<i32>} : memref<8x128xf32, #tpu.memory_space<vmem>>, vector<8x128xf32>,
    return
  }
  func.func @transform_0(%arg0: i32) -> (i32, i32) {
    %c0_i32 = arith.constant 0 : i32
    %c0_i32_0 = arith.constant 0 : i32
    return %arg0, %c0_i32 : i32, i32
  }
  func.func @transform_1(%arg0: i32) -> (i32, i32) {
    %c0_i32 = arith.constant 0 : i32
    %c0_i32_0 = arith.constant 0 : i32
    %c0_i32_1 = arith.constant 0 : i32
    return %c0_i32, %c0_i32_0 : i32, i32
  }
  func.func @transform_2(%arg0: i32) -> (i32, i32) {
    %c0_i32 = arith.constant 0 : i32
    %c0_i32_0 = arith.constant 0 : i32
    %c0_i32_1 = arith.constant 0 : i32
    return %c0_i32, %c0_i32_0 : i32, i32
  }
  func.func @transform_3(%arg0: i32) -> (i32, i32) {
    %c0_i32 = arith.constant 0 : i32
    %c0_i32_0 = arith.constant 0 : i32
    %c0_i32_1 = arith.constant 0 : i32
    return %c0_i32, %c0_i32_0 : i32, i32
  }
  func.func @transform_4(%arg0: i32) -> (i32, i32) {
    %c0_i32 = arith.constant 0 : i32
    %c0_i32_0 = arith.constant 0 : i32
    %c0_i32_1 = arith.constant 0 : i32
    return %c0_i32, %c0_i32_0 : i32, i32
  }
  func.func @transform_5(%arg0: i32) -> (i32, i32) {
    %c0_i32 = arith.constant 0 : i32
    %c0_i32_0 = arith.constant 0 : i32
    %c0_i32_1 = arith.constant 0 : i32
    return %c0_i32, %c0_i32_0 : i32, i32
  }
  func.func @transform_6(%arg0: i32) -> (i32, i32) {
    %c0_i32 = arith.constant 0 : i32
    %c0_i32_0 = arith.constant 0 : i32
    return %arg0, %c0_i32 : i32, i32
  }
}

</mosaic_0001>

<llo_original>
// kernel: tpu_custom_call.1
$region0: #{tpu_custom_call.1}
  #allocation0 [shape = 'u32[]', space=smem, size = 0x4, offset = 0x4, fixed_abs, tag = 'smem constant byte address 0x4 - core index']
  #allocation1 [shape = 'u32[144,128]{1,0:T(1,128)}', space=vmem, size = 0x12000, scoped, tag = 'internal scratch']
  %s0 = inlined_call_operand.vmem [shape: bf16[8,192], index: 0, kind: input, shape index: {}]
  %s1 = inlined_call_operand.vmem [shape: bf16[192,512], index: 1, kind: input, shape index: {}]
  %s2 = inlined_call_operand.hbm [shape: bf16[512,256], index: 2, kind: input, shape index: {}]
  %s3 = inlined_call_operand.hbm [shape: bf16[256,256], index: 3, kind: input, shape index: {}]
  %s4 = inlined_call_operand.vmem [shape: bf16[256,192], index: 4, kind: input, shape index: {}]
  %s5 = inlined_call_operand.hbm [shape: bf16[192,128], index: 5, kind: input, shape index: {}]
  %s6 = inlined_call_operand.hbm [shape: f32[8,128], index: 6, kind: output, shape index: {}]
  %s7 = sld [smem:[#allocation0]]
  $region46: #{tpu_custom_call.1} parent=0
    _
  %s9 = ssub.s32 1, %s7
  %s10 = scalar_select 0, %s9, %s7
  $region1: #{tpu_custom_call.1} parent=0
    #allocation2 [shape = 'u8[262144]{0}', space=vmem, size = 0x40000, scoped, tag = 'input window, operand 2, single buffered']
    #allocation3 [shape = 's32[1]{0}', space=sflag, size = 0x4, scoped, tag = 'scoped memory for tpu_custom_call.1']
    #allocation4 [shape = 's32[1]{0}', space=sflag, size = 0x4, scoped, tag = 'scoped memory for tpu_custom_call.1']
    #allocation5 [shape = 'u8[131072]{0}', space=vmem, size = 0x20000, scoped, tag = 'input window, operand 3, single buffered']
    #allocation6 [shape = 's32[1]{0}', space=sflag, size = 0x4, scoped, tag = 'scoped memory for tpu_custom_call.1']
    #allocation7 [shape = 'u8[49152]{0}', space=vmem, size = 0xc000, scoped, tag = 'input window, operand 5, single buffered']
    #allocation8 [shape = 'u8[4096]{0}', space=vmem, size = 0x1000, scoped, tag = 'output window, operand 0, single buffered']
    %11 = vsyncpa [#allocation3], 0
    %12 = vsyncpa [#allocation6], 0
    %13 = vsyncpa [#allocation4], 0
    // Predicated region
    $region2: #{tpu_custom_call.1} parent=1 // pred_check
      _
    $region3: #{tpu_custom_call.1} parent=1 // pred_check_branch
      %15 = sbr.rel (0) target = $region5
    $region4: #{tpu_custom_call.1} parent=1 // pred_region
      _
    $region5: #{tpu_custom_call.1} parent=1 // pred_fallthru
      _
    // Predicated region
    $region6: #{tpu_custom_call.1} parent=1 // pred_check
      _
    $region7: #{tpu_custom_call.1} parent=1 // pred_check_branch
      %17 = sbr.rel (0) target = $region9
    $region8: #{tpu_custom_call.1} parent=1 // pred_region
      _
    $region9: #{tpu_custom_call.1} parent=1 // pred_fallthru
      _
    // Predicated region
    $region10: #{tpu_custom_call.1} parent=1 // pred_check
      _
    $region11: #{tpu_custom_call.1} parent=1 // pred_check_branch
      %19 = sbr.rel (0) target = $region13
    $region12: #{tpu_custom_call.1} parent=1 // pred_region
      %s21 = ssub.s32 8192, 8192
      %22 = vsyncadd [#allocation3], %s21
      %s23 = sshll.u32 [#allocation2], 4
      %s24 = int_to_ptr.vmem [resolvable:$true] %s23
      %29 = dma.hbm_to_vmem [thread:$0]  %s2, 8192, %s24, [#allocation3], 128, 128, 8
    $region13: #{tpu_custom_call.1} parent=1 // pred_fallthru
      _
    // Predicated region
    $region14: #{tpu_custom_call.1} parent=1 // pred_check
      _
    $region15: #{tpu_custom_call.1} parent=1 // pred_check_branch
      %31 = sbr.rel (0) target = $region17
    $region16: #{tpu_custom_call.1} parent=1 // pred_region
      %s33 = ssub.s32 4096, 4096
      %34 = vsyncadd [#allocation6], %s33
      %s35 = sshll.u32 [#allocation5], 4
      %s36 = int_to_ptr.vmem [resolvable:$true] %s35
      %41 = dma.hbm_to_vmem [thread:$0]  %s3, 4096, %s36, [#allocation6], 128, 128, 8
    $region17: #{tpu_custom_call.1} parent=1 // pred_fallthru
      _
    // Predicated region
    $region18: #{tpu_custom_call.1} parent=1 // pred_check
      _
    $region19: #{tpu_custom_call.1} parent=1 // pred_check_branch
      %43 = sbr.rel (0) target = $region21
    $region20: #{tpu_custom_call.1} parent=1 // pred_region
      _
    $region21: #{tpu_custom_call.1} parent=1 // pred_fallthru
      _
    // Predicated region
    $region22: #{tpu_custom_call.1} parent=1 // pred_check
      _
    $region23: #{tpu_custom_call.1} parent=1 // pred_check_branch
      %45 = sbr.rel (0) target = $region25
    $region24: #{tpu_custom_call.1} parent=1 // pred_region
      %s47 = ssub.s32 1536, 1536
      %48 = vsyncadd [#allocation6], %s47
      %s49 = sshll.u32 [#allocation7], 4
      %s50 = int_to_ptr.vmem [resolvable:$true] %s49
      %55 = dma.hbm_to_vmem [thread:$0]  %s5, 1536, %s50, [#allocation6], 64, 64, 4
    $region25: #{tpu_custom_call.1} parent=1 // pred_fallthru
      _
    // Predicated region
    $region26: #{tpu_custom_call.1} parent=1 // pred_check
      _
    $region27: #{tpu_custom_call.1} parent=1 // pred_check_branch
      %57 = sbr.rel (0) target = $region29
    $region28: #{tpu_custom_call.1} parent=1 // pred_region
      %58 = dma.done [#allocation3], 8192
    $region29: #{tpu_custom_call.1} parent=1 // pred_fallthru
      _
    // Predicated region
    $region30: #{tpu_custom_call.1} parent=1 // pred_check
      _
    $region31: #{tpu_custom_call.1} parent=1 // pred_check_branch
      %60 = sbr.rel (0) target = $region33
    $region32: #{tpu_custom_call.1} parent=1 // pred_region
      %61 = dma.done [#allocation6], 4096
    $region33: #{tpu_custom_call.1} parent=1 // pred_fallthru
      _
    // Predicated region
    $region34: #{tpu_custom_call.1} parent=1 // pred_check
      _
    $region35: #{tpu_custom_call.1} parent=1 // pred_check_branch
      %63 = sbr.rel (0) target = $region37
    $region36: #{tpu_custom_call.1} parent=1 // pred_region
      %64 = dma.done [#allocation6], 1536
    $region37: #{tpu_custom_call.1} parent=1 // pred_fallthru
      _
    %v66 = vld [vmem:[%s0] sm:$0xff]
    %v67 = vld [vmem:[%s1] sm:$0xff]
    %v68 = vld [vmem:[%s1 + $0x8] sm:$0xff]
    %v69 = vld [vmem:[%s1 + $0x10] sm:$0xff]
    %v70 = vld [vmem:[%s1 + $0x18] sm:$0xff]
    %v71 = vld [vmem:[%s1 + $0x20] sm:$0xff]
    %v72 = vld [vmem:[%s1 + $0x28] sm:$0xff]
    %v73 = vld [vmem:[%s1 + $0x30] sm:$0xff]
    %v74 = vld [vmem:[%s1 + $0x38] sm:$0xff]
    %v75 = vld [vmem:[%s1 + $0x40] sm:$0xff]
    %v76 = vld [vmem:[%s1 + $0x48] sm:$0xff]
    %v77 = vld [vmem:[%s1 + $0x50] sm:$0xff]
    %v78 = vld [vmem:[%s1 + $0x58] sm:$0xff]
    %v79 = vld [vmem:[%s1 + $0x60] sm:$0xff]
    %v80 = vld [vmem:[%s1 + $0x68] sm:$0xff]
    %v81 = vld [vmem:[%s1 + $0x70] sm:$0xff]
    %v82 = vld [vmem:[%s1 + $0x78] sm:$0xff]
    %v83 = vld [vmem:[%s1 + $0x80] sm:$0xff]
    %v84 = vld [vmem:[%s1 + $0x88] sm:$0xff]
    %v85 = vld [vmem:[%s1 + $0x90] sm:$0xff]
    %v86 = vld [vmem:[%s1 + $0x98] sm:$0xff]
    %v87 = vld [vmem:[%s1 + $0xa0] sm:$0xff]
    %v88 = vld [vmem:[%s1 + $0xa8] sm:$0xff]
    %v89 = vld [vmem:[%s1 + $0xb0] sm:$0xff]
    %v90 = vld [vmem:[%s1 + $0xb8] sm:$0xff]
    %v91 = vld [vmem:[%s1 + $0xc0] sm:$0xff]
    %v92 = vld [vmem:[%s1 + $0xc8] sm:$0xff]
    %v93 = vld [vmem:[%s1 + $0xd0] sm:$0xff]
    %v94 = vld [vmem:[%s1 + $0xd8] sm:$0xff]
    %v95 = vld [vmem:[%s1 + $0xe0] sm:$0xff]
    %v96 = vld [vmem:[%s1 + $0xe8] sm:$0xff]
    %v97 = vld [vmem:[%s1 + $0xf0] sm:$0xff]
    %v98 = vld [vmem:[%s1 + $0xf8] sm:$0xff]
    %v99 = vld [vmem:[%s1 + $0x100] sm:$0xff]
    %v100 = vld [vmem:[%s1 + $0x108] sm:$0xff]
    %v101 = vld [vmem:[%s1 + $0x110] sm:$0xff]
    %v102 = vld [vmem:[%s1 + $0x118] sm:$0xff]
    %v103 = vld [vmem:[%s1 + $0x120] sm:$0xff]
    %v104 = vld [vmem:[%s1 + $0x128] sm:$0xff]
    %v105 = vld [vmem:[%s1 + $0x130] sm:$0xff]
    %v106 = vld [vmem:[%s1 + $0x138] sm:$0xff]
    %v107 = vld [vmem:[%s1 + $0x140] sm:$0xff]
    %v108 = vld [vmem:[%s1 + $0x148] sm:$0xff]
    %v109 = vld [vmem:[%s1 + $0x150] sm:$0xff]
    %v110 = vld [vmem:[%s1 + $0x158] sm:$0xff]
    %v111 = vld [vmem:[%s1 + $0x160] sm:$0xff]
    %v112 = vld [vmem:[%s1 + $0x168] sm:$0xff]
    %v113 = vld [vmem:[%s1 + $0x170] sm:$0xff]
    %v114 = vld [vmem:[%s1 + $0x178] sm:$0xff]
    %v116 = vunpack.c.l.b16 %v66
    %v117 = vunpack.c.h.b16 %v66
    %v118 = vpack.c.b16 %v116, %v116
    %v119 = vpack.c.b16 %v117, %v117
    %v169 = vunpack.c.l.b16 %v67
    %v170 = vunpack.c.h.b16 %v67
    %v171 = vunpack.c.l.b16 %v68
    %v172 = vunpack.c.h.b16 %v68
    %v173 = vunpack.c.l.b16 %v69
    %v174 = vunpack.c.h.b16 %v69
    %v175 = vunpack.c.l.b16 %v70
    %v176 = vunpack.c.h.b16 %v70
    %v177 = vunpack.c.l.b16 %v71
    %v178 = vunpack.c.h.b16 %v71
    %v179 = vunpack.c.l.b16 %v72
    %v180 = vunpack.c.h.b16 %v72
    %v181 = vunpack.c.l.b16 %v73
    %v182 = vunpack.c.h.b16 %v73
    %v183 = vunpack.c.l.b16 %v74
    %v184 = vunpack.c.h.b16 %v74
    %v185 = vunpack.c.l.b16 %v75
    %v186 = vunpack.c.h.b16 %v75
    %v187 = vunpack.c.l.b16 %v76
    %v188 = vunpack.c.h.b16 %v76
    %v189 = vunpack.c.l.b16 %v77
    %v190 = vunpack.c.h.b16 %v77
    %v191 = vunpack.c.l.b16 %v78
    %v192 = vunpack.c.h.b16 %v78
    %v193 = vunpack.c.l.b16 %v79
    %v194 = vunpack.c.h.b16 %v79
    %v195 = vunpack.c.l.b16 %v80
    %v196 = vunpack.c.h.b16 %v80
    %v197 = vunpack.c.l.b16 %v81
    %v198 = vunpack.c.h.b16 %v81
    %v199 = vunpack.c.l.b16 %v82
    %v200 = vunpack.c.h.b16 %v82
    %v201 = vunpack.c.l.b16 %v83
    %v202 = vunpack.c.h.b16 %v83
    %v203 = vunpack.c.l.b16 %v84
    %v204 = vunpack.c.h.b16 %v84
    %v205 = vunpack.c.l.b16 %v85
    %v206 = vunpack.c.h.b16 %v85
    %v207 = vunpack.c.l.b16 %v86
    %v208 = vunpack.c.h.b16 %v86
    %v209 = vunpack.c.l.b16 %v87
    %v210 = vunpack.c.h.b16 %v87
    %v211 = vunpack.c.l.b16 %v88
    %v212 = vunpack.c.h.b16 %v88
    %v213 = vunpack.c.l.b16 %v89
    %v214 = vunpack.c.h.b16 %v89
    %v215 = vunpack.c.l.b16 %v90
    %v216 = vunpack.c.h.b16 %v90
    %v217 = vunpack.c.l.b16 %v91
    %v218 = vunpack.c.h.b16 %v91
    %v219 = vunpack.c.l.b16 %v92
    %v220 = vunpack.c.h.b16 %v92
    %v221 = vunpack.c.l.b16 %v93
    %v222 = vunpack.c.h.b16 %v93
    %v223 = vunpack.c.l.b16 %v94
    %v224 = vunpack.c.h.b16 %v94
    %v225 = vunpack.c.l.b16 %v95
    %v226 = vunpack.c.h.b16 %v95
    %v227 = vunpack.c.l.b16 %v96
    %v228 = vunpack.c.h.b16 %v96
    %v229 = vunpack.c.l.b16 %v97
    %v230 = vunpack.c.h.b16 %v97
    %v231 = vunpack.c.l.b16 %v98
    %v232 = vunpack.c.h.b16 %v98
    %v233 = vunpack.c.l.b16 %v99
    %v234 = vunpack.c.h.b16 %v99
    %v235 = vunpack.c.l.b16 %v100
    %v236 = vunpack.c.h.b16 %v100
    %v237 = vunpack.c.l.b16 %v101
    %v238 = vunpack.c.h.b16 %v101
    %v239 = vunpack.c.l.b16 %v102
    %v240 = vunpack.c.h.b16 %v102
    %v241 = vunpack.c.l.b16 %v103
    %v242 = vunpack.c.h.b16 %v103
    %v243 = vunpack.c.l.b16 %v104
    %v244 = vunpack.c.h.b16 %v104
    %v245 = vunpack.c.l.b16 %v105
    %v246 = vunpack.c.h.b16 %v105
    %v247 = vunpack.c.l.b16 %v106
    %v248 = vunpack.c.h.b16 %v106
    %v249 = vunpack.c.l.b16 %v107
    %v250 = vunpack.c.h.b16 %v107
    %v251 = vunpack.c.l.b16 %v108
    %v252 = vunpack.c.h.b16 %v108
    %v253 = vunpack.c.l.b16 %v109
    %v254 = vunpack.c.h.b16 %v109
    %v255 = vunpack.c.l.b16 %v110
    %v256 = vunpack.c.h.b16 %v110
    %v257 = vunpack.c.l.b16 %v111
    %v258 = vunpack.c.h.b16 %v111
    %v259 = vunpack.c.l.b16 %v112
    %v260 = vunpack.c.h.b16 %v112
    %v261 = vunpack.c.l.b16 %v113
    %v262 = vunpack.c.h.b16 %v113
    %v263 = vunpack.c.l.b16 %v114
    %v264 = vunpack.c.h.b16 %v114
    %v265 = vpack.c.b16 %v173, %v169
    %v266 = vpack.c.b16 %v174, %v170
    %v267 = vpack.c.b16 %v175, %v171
    %v268 = vpack.c.b16 %v176, %v172
    %v269 = vpack.c.b16 %v181, %v177
    %v270 = vpack.c.b16 %v182, %v178
    %v271 = vpack.c.b16 %v183, %v179
    %v272 = vpack.c.b16 %v184, %v180
    %v273 = vpack.c.b16 %v189, %v185
    %v274 = vpack.c.b16 %v190, %v186
    %v275 = vpack.c.b16 %v191, %v187
    %v276 = vpack.c.b16 %v192, %v188
    %v277 = vpack.c.b16 %v197, %v193
    %v278 = vpack.c.b16 %v198, %v194
    %v279 = vpack.c.b16 %v199, %v195
    %v280 = vpack.c.b16 %v200, %v196
    %v281 = vpack.c.b16 %v205, %v201
    %v282 = vpack.c.b16 %v206, %v202
    %v283 = vpack.c.b16 %v207, %v203
    %v284 = vpack.c.b16 %v208, %v204
    %v285 = vpack.c.b16 %v213, %v209
    %v286 = vpack.c.b16 %v214, %v210
    %v287 = vpack.c.b16 %v215, %v211
    %v288 = vpack.c.b16 %v216, %v212
    %v289 = vpack.c.b16 %v221, %v217
    %v290 = vpack.c.b16 %v222, %v218
    %v291 = vpack.c.b16 %v223, %v219
    %v292 = vpack.c.b16 %v224, %v220
    %v293 = vpack.c.b16 %v229, %v225
    %v294 = vpack.c.b16 %v230, %v226
    %v295 = vpack.c.b16 %v231, %v227
    %v296 = vpack.c.b16 %v232, %v228
    %v297 = vpack.c.b16 %v237, %v233
    %v298 = vpack.c.b16 %v238, %v234
    %v299 = vpack.c.b16 %v239, %v235
    %v300 = vpack.c.b16 %v240, %v236
    %v301 = vpack.c.b16 %v245, %v241
    %v302 = vpack.c.b16 %v246, %v242
    %v303 = vpack.c.b16 %v247, %v243
    %v304 = vpack.c.b16 %v248, %v244
    %v305 = vpack.c.b16 %v253, %v249
    %v306 = vpack.c.b16 %v254, %v250
    %v307 = vpack.c.b16 %v255, %v251
    %v308 = vpack.c.b16 %v256, %v252
    %v309 = vpack.c.b16 %v261, %v257
    %v310 = vpack.c.b16 %v262, %v258
    %v311 = vpack.c.b16 %v263, %v259
    %v312 = vpack.c.b16 %v264, %v260
    %vm361 = vcmask 523264
    %v363 = vsel %vm361, %v119, 0
    %365 = vmatprep.subr.bf16.mxu0 %v294
    %366 = vmatpush1.bf16.msra.mxu0 %v293
    %367 = vmatprep.subr.bf16.mxu0 %v290
    %368 = vmatpush1.bf16.msra.mxu0 %v289
    %369 = vmatprep.subr.bf16.mxu0 %v286
    %370 = vmatpush1.bf16.msra.mxu0 %v285
    %371 = vmatprep.subr.bf16.mxu0 %v282
    %372 = vmatpush1.bf16.msra.mxu0 %v281
    %373 = vmatprep.subr.bf16.mxu0 %v278
    %374 = vmatpush1.bf16.msra.mxu0 %v277
    %375 = vmatprep.subr.bf16.mxu0 %v274
    %376 = vmatpush1.bf16.msra.mxu0 %v273
    %377 = vmatprep.subr.bf16.mxu0 %v270
    %378 = vmatpush1.bf16.msra.mxu0 %v269
    %379 = vmatprep.subr.bf16.mxu0 %v266
    %380 = vmatpush1.bf16.msra.mxu0 %v265
    %381 = vmatprep.subr.bf16.mxu0 0
    %382 = vmatpush2.bf16.msra.mxu0 0
    %383 = vmatprep.subr.bf16.mxu0 0
    %384 = vmatpush2.bf16.msra.mxu0 0
    %385 = vmatprep.subr.bf16.mxu0 0
    %386 = vmatpush2.bf16.msra.mxu0 0
    %387 = vmatprep.subr.bf16.mxu0 0
    %388 = vmatpush2.bf16.msra.mxu0 0
    %389 = vmatprep.subr.bf16.mxu0 %v310
    %390 = vmatpush2.bf16.msra.mxu0 %v309
    %391 = vmatprep.subr.bf16.mxu0 %v306
    %392 = vmatpush2.bf16.msra.mxu0 %v305
    %393 = vmatprep.subr.bf16.mxu0 %v302
    %394 = vmatpush2.bf16.msra.mxu0 %v301
    %395 = vmatprep.subr.bf16.mxu0 %v298
    %396 = vmatpush2.bf16.msra.mxu0 %v297
    %397 = vmatprep.mubr.bf16.mxu0 %v363
    %398 = vmatmul.mubr.bf16.gmra.mxu0 %v118
    %v399 = vpop.f32.mrf.mxu0
    %v400 = vadd.f32 0.0, %v399
    %v401 = vpop.f32.mrf.mxu0
    %v402 = vadd.f32 0.0, %v401
    %v403 = vpop.f32.mrf.mxu0
    %v404 = vpop.f32.mrf.mxu0
    %405 = vdwg.mxu0
    %406 = vmatprep.subr.bf16.mxu0 %v296
    %407 = vmatpush1.bf16.msra.mxu0 %v295
    %408 = vmatprep.subr.bf16.mxu0 %v292
    %409 = vmatpush1.bf16.msra.mxu0 %v291
    %410 = vmatprep.subr.bf16.mxu0 %v288
    %411 = vmatpush1.bf16.msra.mxu0 %v287
    %412 = vmatprep.subr.bf16.mxu0 %v284
    %413 = vmatpush1.bf16.msra.mxu0 %v283
    %414 = vmatprep.subr.bf16.mxu0 %v280
    %415 = vmatpush1.bf16.msra.mxu0 %v279
    %416 = vmatprep.subr.bf16.mxu0 %v276
    %417 = vmatpush1.bf16.msra.mxu0 %v275
    %418 = vmatprep.subr.bf16.mxu0 %v272
    %419 = vmatpush1.bf16.msra.mxu0 %v271
    %420 = vmatprep.subr.bf16.mxu0 %v268
    %421 = vmatpush1.bf16.msra.mxu0 %v267
    %422 = vmatprep.subr.bf16.mxu0 0
    %423 = vmatpush2.bf16.msra.mxu0 0
    %424 = vmatprep.subr.bf16.mxu0 0
    %425 = vmatpush2.bf16.msra.mxu0 0
    %426 = vmatprep.subr.bf16.mxu0 0
    %427 = vmatpush2.bf16.msra.mxu0 0
    %428 = vmatprep.subr.bf16.mxu0 0
    %429 = vmatpush2.bf16.msra.mxu0 0
    %430 = vmatprep.subr.bf16.mxu0 %v312
    %431 = vmatpush2.bf16.msra.mxu0 %v311
    %432 = vmatprep.subr.bf16.mxu0 %v308
    %433 = vmatpush2.bf16.msra.mxu0 %v307
    %434 = vmatprep.subr.bf16.mxu0 %v304
    %435 = vmatpush2.bf16.msra.mxu0 %v303
    %436 = vmatprep.subr.bf16.mxu0 %v300
    %437 = vmatpush2.bf16.msra.mxu0 %v299
    %438 = vmatprep.mubr.bf16.mxu0 %v363
    %439 = vmatmul.mubr.bf16.gmra.mxu0 %v118
    %v440 = vpop.f32.mrf.mxu0
    %v441 = vadd.f32 0.0, %v440
    %v442 = vpop.f32.mrf.mxu0
    %v443 = vadd.f32 0.0, %v442
    %v444 = vpop.f32.mrf.mxu0
    %v445 = vpop.f32.mrf.mxu0
    %446 = vdwg.mxu0
    %v447 = vadd.f32 %v400, %v402
    %v448 = vadd.f32 %v447, %v441
    %v449 = vadd.f32 %v448, %v443
    %450 = vadd.xlane.f32.xlu0 %v449
    %v451 = vpop.xlane.xlu0 %450
    %v452 = vrcp.pop 512.0
    %v453 = vmul.f32 %v451, %v452
    %v454 = vsub.f32 %v400, %v453
    %v455 = vsub.f32 %v402, %v453
    %v456 = vsub.f32 %v441, %v453
    %v457 = vsub.f32 %v443, %v453
    %v458 = vmul.f32 %v454, %v454
    %v459 = vmul.f32 %v455, %v455
    %v460 = vmul.f32 %v456, %v456
    %v461 = vmul.f32 %v457, %v457
    %v462 = vadd.f32 %v458, %v459
    %v463 = vadd.f32 %v462, %v460
    %v464 = vadd.f32 %v463, %v461
    %465 = vadd.xlane.f32.xlu0 %v464
    %v466 = vpop.xlane.xlu0 %465
    %v467 = vmul.f32 %v466, %v452
    %v468 = vadd.f32 %v467, 1e-05
    %v469 = vrsqrt.pop %v468
    %v470 = vmul.f32 %v454, %v469
    %v471 = vmul.f32 %v455, %v469
    %v472 = vmul.f32 %v456, %v469
    %v473 = vmul.f32 %v457, %v469
    %v474 = vmax.f32 %v470, 0.0
    %v475 = vmax.f32 %v471, 0.0
    %v476 = vmax.f32 %v472, 0.0
    %v477 = vmax.f32 %v473, 0.0
    %v478 = vpack.c.bf16 %v474, %v474
    %v479 = vpack.c.bf16 %v475, %v475
    %v480 = vpack.c.bf16 %v476, %v476
    %v481 = vpack.c.bf16 %v477, %v477
    %v482 = vld [vmem:[#allocation2] sm:$0xff]
    %v483 = vld [vmem:[#allocation2 + $0x8] sm:$0xff]
    %v484 = vld [vmem:[#allocation2 + $0x10] sm:$0xff]
    %v485 = vld [vmem:[#allocation2 + $0x18] sm:$0xff]
    %v486 = vld [vmem:[#allocation2 + $0x20] sm:$0xff]
    %v487 = vld [vmem:[#allocation2 + $0x28] sm:$0xff]
    %v488 = vld [vmem:[#allocation2 + $0x30] sm:$0xff]
    %v489 = vld [vmem:[#allocation2 + $0x38] sm:$0xff]
    %v490 = vld [vmem:[#allocation2 + $0x40] sm:$0xff]
    %v491 = vld [vmem:[#allocation2 + $0x48] sm:$0xff]
    %v492 = vld [vmem:[#allocation2 + $0x50] sm:$0xff]
    %v493 = vld [vmem:[#allocation2 + $0x58] sm:$0xff]
    %v494 = vld [vmem:[#allocation2 + $0x60] sm:$0xff]
    %v495 = vld [vmem:[#allocation2 + $0x68] sm:$0xff]
    %v496 = vld [vmem:[#allocation2 + $0x70] sm:$0xff]
    %v497 = vld [vmem:[#allocation2 + $0x78] sm:$0xff]
    %v498 = vld [vmem:[#allocation2 + $0x80] sm:$0xff]
    %v499 = vld [vmem:[#allocation2 + $0x88] sm:$0xff]
    %v500 = vld [vmem:[#allocation2 + $0x90] sm:$0xff]
    %v501 = vld [vmem:[#allocation2 + $0x98] sm:$0xff]
    %v502 = vld [vmem:[#allocation2 + $0xa0] sm:$0xff]
    %v503 = vld [vmem:[#allocation2 + $0xa8] sm:$0xff]
    %v504 = vld [vmem:[#allocation2 + $0xb0] sm:$0xff]
    %v505 = vld [vmem:[#allocation2 + $0xb8] sm:$0xff]
    %v506 = vld [vmem:[#allocation2 + $0xc0] sm:$0xff]
    %v507 = vld [vmem:[#allocation2 + $0xc8] sm:$0xff]
    %v508 = vld [vmem:[#allocation2 + $0xd0] sm:$0xff]
    %v509 = vld [vmem:[#allocation2 + $0xd8] sm:$0xff]
    %v510 = vld [vmem:[#allocation2 + $0xe0] sm:$0xff]
    %v511 = vld [vmem:[#allocation2 + $0xe8] sm:$0xff]
    %v512 = vld [vmem:[#allocation2 + $0xf0] sm:$0xff]
    %v513 = vld [vmem:[#allocation2 + $0xf8] sm:$0xff]
    %v514 = vld [vmem:[#allocation2 + $0x100] sm:$0xff]
    %v515 = vld [vmem:[#allocation2 + $0x108] sm:$0xff]
    %v516 = vld [vmem:[#allocation2 + $0x110] sm:$0xff]
    %v517 = vld [vmem:[#allocation2 + $0x118] sm:$0xff]
    %v518 = vld [vmem:[#allocation2 + $0x120] sm:$0xff]
    %v519 = vld [vmem:[#allocation2 + $0x128] sm:$0xff]
    %v520 = vld [vmem:[#allocation2 + $0x130] sm:$0xff]
    %v521 = vld [vmem:[#allocation2 + $0x138] sm:$0xff]
    %v522 = vld [vmem:[#allocation2 + $0x140] sm:$0xff]
    %v523 = vld [vmem:[#allocation2 + $0x148] sm:$0xff]
    %v524 = vld [vmem:[#allocation2 + $0x150] sm:$0xff]
    %v525 = vld [vmem:[#allocation2 + $0x158] sm:$0xff]
    %v526 = vld [vmem:[#allocation2 + $0x160] sm:$0xff]
    %v527 = vld [vmem:[#allocation2 + $0x168] sm:$0xff]
    %v528 = vld [vmem:[#allocation2 + $0x170] sm:$0xff]
    %v529 = vld [vmem:[#allocation2 + $0x178] sm:$0xff]
    %v530 = vld [vmem:[#allocation2 + $0x180] sm:$0xff]
    %v531 = vld [vmem:[#allocation2 + $0x188] sm:$0xff]
    %v532 = vld [vmem:[#allocation2 + $0x190] sm:$0xff]
    %v533 = vld [vmem:[#allocation2 + $0x198] sm:$0xff]
    %v534 = vld [vmem:[#allocation2 + $0x1a0] sm:$0xff]
    %v535 = vld [vmem:[#allocation2 + $0x1a8] sm:$0xff]
    %v536 = vld [vmem:[#allocation2 + $0x1b0] sm:$0xff]
    %v537 = vld [vmem:[#allocation2 + $0x1b8] sm:$0xff]
    %v538 = vld [vmem:[#allocation2 + $0x1c0] sm:$0xff]
    %v539 = vld [vmem:[#allocation2 + $0x1c8] sm:$0xff]
    %v540 = vld [vmem:[#allocation2 + $0x1d0] sm:$0xff]
    %v541 = vld [vmem:[#allocation2 + $0x1d8] sm:$0xff]
    %v542 = vld [vmem:[#allocation2 + $0x1e0] sm:$0xff]
    %v543 = vld [vmem:[#allocation2 + $0x1e8] sm:$0xff]
    %v544 = vld [vmem:[#allocation2 + $0x1f0] sm:$0xff]
    %v545 = vld [vmem:[#allocation2 + $0x1f8] sm:$0xff]
    %v610 = vunpack.c.l.b16 %v482
    %v611 = vunpack.c.h.b16 %v482
    %v612 = vunpack.c.l.b16 %v483
    %v613 = vunpack.c.h.b16 %v483
    %v614 = vunpack.c.l.b16 %v484
    %v615 = vunpack.c.h.b16 %v484
    %v616 = vunpack.c.l.b16 %v485
    %v617 = vunpack.c.h.b16 %v485
    %v618 = vunpack.c.l.b16 %v486
    %v619 = vunpack.c.h.b16 %v486
    %v620 = vunpack.c.l.b16 %v487
    %v621 = vunpack.c.h.b16 %v487
    %v622 = vunpack.c.l.b16 %v488
    %v623 = vunpack.c.h.b16 %v488
    %v624 = vunpack.c.l.b16 %v489
    %v625 = vunpack.c.h.b16 %v489
    %v626 = vunpack.c.l.b16 %v490
    %v627 = vunpack.c.h.b16 %v490
    %v628 = vunpack.c.l.b16 %v491
    %v629 = vunpack.c.h.b16 %v491
    %v630 = vunpack.c.l.b16 %v492
    %v631 = vunpack.c.h.b16 %v492
    %v632 = vunpack.c.l.b16 %v493
    %v633 = vunpack.c.h.b16 %v493
    %v634 = vunpack.c.l.b16 %v494
    %v635 = vunpack.c.h.b16 %v494
    %v636 = vunpack.c.l.b16 %v495
    %v637 = vunpack.c.h.b16 %v495
    %v638 = vunpack.c.l.b16 %v496
    %v639 = vunpack.c.h.b16 %v496
    %v640 = vunpack.c.l.b16 %v497
    %v641 = vunpack.c.h.b16 %v497
    %v642 = vunpack.c.l.b16 %v498
    %v643 = vunpack.c.h.b16 %v498
    %v644 = vunpack.c.l.b16 %v499
    %v645 = vunpack.c.h.b16 %v499
    %v646 = vunpack.c.l.b16 %v500
    %v647 = vunpack.c.h.b16 %v500
    %v648 = vunpack.c.l.b16 %v501
    %v649 = vunpack.c.h.b16 %v501
    %v650 = vunpack.c.l.b16 %v502
    %v651 = vunpack.c.h.b16 %v502
    %v652 = vunpack.c.l.b16 %v503
    %v653 = vunpack.c.h.b16 %v503
    %v654 = vunpack.c.l.b16 %v504
    %v655 = vunpack.c.h.b16 %v504
    %v656 = vunpack.c.l.b16 %v505
    %v657 = vunpack.c.h.b16 %v505
    %v658 = vunpack.c.l.b16 %v506
    %v659 = vunpack.c.h.b16 %v506
    %v660 = vunpack.c.l.b16 %v507
    %v661 = vunpack.c.h.b16 %v507
    %v662 = vunpack.c.l.b16 %v508
    %v663 = vunpack.c.h.b16 %v508
    %v664 = vunpack.c.l.b16 %v509
    %v665 = vunpack.c.h.b16 %v509
    %v666 = vunpack.c.l.b16 %v510
    %v667 = vunpack.c.h.b16 %v510
    %v668 = vunpack.c.l.b16 %v511
    %v669 = vunpack.c.h.b16 %v511
    %v670 = vunpack.c.l.b16 %v512
    %v671 = vunpack.c.h.b16 %v512
    %v672 = vunpack.c.l.b16 %v513
    %v673 = vunpack.c.h.b16 %v513
    %v674 = vunpack.c.l.b16 %v514
    %v675 = vunpack.c.h.b16 %v514
    %v676 = vunpack.c.l.b16 %v515
    %v677 = vunpack.c.h.b16 %v515
    %v678 = vunpack.c.l.b16 %v516
    %v679 = vunpack.c.h.b16 %v516
    %v680 = vunpack.c.l.b16 %v517
    %v681 = vunpack.c.h.b16 %v517
    %v682 = vunpack.c.l.b16 %v518
    %v683 = vunpack.c.h.b16 %v518
    %v684 = vunpack.c.l.b16 %v519
    %v685 = vunpack.c.h.b16 %v519
    %v686 = vunpack.c.l.b16 %v520
    %v687 = vunpack.c.h.b16 %v520
    %v688 = vunpack.c.l.b16 %v521
    %v689 = vunpack.c.h.b16 %v521
    %v690 = vunpack.c.l.b16 %v522
    %v691 = vunpack.c.h.b16 %v522
    %v692 = vunpack.c.l.b16 %v523
    %v693 = vunpack.c.h.b16 %v523
    %v694 = vunpack.c.l.b16 %v524
    %v695 = vunpack.c.h.b16 %v524
    %v696 = vunpack.c.l.b16 %v525
    %v697 = vunpack.c.h.b16 %v525
    %v698 = vunpack.c.l.b16 %v526
    %v699 = vunpack.c.h.b16 %v526
    %v700 = vunpack.c.l.b16 %v527
    %v701 = vunpack.c.h.b16 %v527
    %v702 = vunpack.c.l.b16 %v528
    %v703 = vunpack.c.h.b16 %v528
    %v704 = vunpack.c.l.b16 %v529
    %v705 = vunpack.c.h.b16 %v529
    %v706 = vunpack.c.l.b16 %v530
    %v707 = vunpack.c.h.b16 %v530
    %v708 = vunpack.c.l.b16 %v531
    %v709 = vunpack.c.h.b16 %v531
    %v710 = vunpack.c.l.b16 %v532
    %v711 = vunpack.c.h.b16 %v532
    %v712 = vunpack.c.l.b16 %v533
    %v713 = vunpack.c.h.b16 %v533
    %v714 = vunpack.c.l.b16 %v534
    %v715 = vunpack.c.h.b16 %v534
    %v716 = vunpack.c.l.b16 %v535
    %v717 = vunpack.c.h.b16 %v535
    %v718 = vunpack.c.l.b16 %v536
    %v719 = vunpack.c.h.b16 %v536
    %v720 = vunpack.c.l.b16 %v537
    %v721 = vunpack.c.h.b16 %v537
    %v722 = vunpack.c.l.b16 %v538
    %v723 = vunpack.c.h.b16 %v538
    %v724 = vunpack.c.l.b16 %v539
    %v725 = vunpack.c.h.b16 %v539
    %v726 = vunpack.c.l.b16 %v540
    %v727 = vunpack.c.h.b16 %v540
    %v728 = vunpack.c.l.b16 %v541
    %v729 = vunpack.c.h.b16 %v541
    %v730 = vunpack.c.l.b16 %v542
    %v731 = vunpack.c.h.b16 %v542
    %v732 = vunpack.c.l.b16 %v543
    %v733 = vunpack.c.h.b16 %v543
    %v734 = vunpack.c.l.b16 %v544
    %v735 = vunpack.c.h.b16 %v544
    %v736 = vunpack.c.l.b16 %v545
    %v737 = vunpack.c.h.b16 %v545
    %v738 = vpack.c.b16 %v612, %v610
    %v739 = vpack.c.b16 %v613, %v611
    %v740 = vpack.c.b16 %v616, %v614
    %v741 = vpack.c.b16 %v617, %v615
    %v742 = vpack.c.b16 %v620, %v618
    %v743 = vpack.c.b16 %v621, %v619
    %v744 = vpack.c.b16 %v624, %v622
    %v745 = vpack.c.b16 %v625, %v623
    %v746 = vpack.c.b16 %v628, %v626
    %v747 = vpack.c.b16 %v629, %v627
    %v748 = vpack.c.b16 %v632, %v630
    %v749 = vpack.c.b16 %v633, %v631
    %v750 = vpack.c.b16 %v636, %v634
    %v751 = vpack.c.b16 %v637, %v635
    %v752 = vpack.c.b16 %v640, %v638
    %v753 = vpack.c.b16 %v641, %v639
    %v754 = vpack.c.b16 %v644, %v642
    %v755 = vpack.c.b16 %v645, %v643
    %v756 = vpack.c.b16 %v648, %v646
    %v757 = vpack.c.b16 %v649, %v647
    %v758 = vpack.c.b16 %v652, %v650
    %v759 = vpack.c.b16 %v653, %v651
    %v760 = vpack.c.b16 %v656, %v654
    %v761 = vpack.c.b16 %v657, %v655
    %v762 = vpack.c.b16 %v660, %v658
    %v763 = vpack.c.b16 %v661, %v659
    %v764 = vpack.c.b16 %v664, %v662
    %v765 = vpack.c.b16 %v665, %v663
    %v766 = vpack.c.b16 %v668, %v666
    %v767 = vpack.c.b16 %v669, %v667
    %v768 = vpack.c.b16 %v672, %v670
    %v769 = vpack.c.b16 %v673, %v671
    %v770 = vpack.c.b16 %v676, %v674
    %v771 = vpack.c.b16 %v677, %v675
    %v772 = vpack.c.b16 %v680, %v678
    %v773 = vpack.c.b16 %v681, %v679
    %v774 = vpack.c.b16 %v684, %v682
    %v775 = vpack.c.b16 %v685, %v683
    %v776 = vpack.c.b16 %v688, %v686
    %v777 = vpack.c.b16 %v689, %v687
    %v778 = vpack.c.b16 %v692, %v690
    %v779 = vpack.c.b16 %v693, %v691
    %v780 = vpack.c.b16 %v696, %v694
    %v781 = vpack.c.b16 %v697, %v695
    %v782 = vpack.c.b16 %v700, %v698
    %v783 = vpack.c.b16 %v701, %v699
    %v784 = vpack.c.b16 %v704, %v702
    %v785 = vpack.c.b16 %v705, %v703
    %v786 = vpack.c.b16 %v708, %v706
    %v787 = vpack.c.b16 %v709, %v707
    %v788 = vpack.c.b16 %v712, %v710
    %v789 = vpack.c.b16 %v713, %v711
    %v790 = vpack.c.b16 %v716, %v714
    %v791 = vpack.c.b16 %v717, %v715
    %v792 = vpack.c.b16 %v720, %v718
    %v793 = vpack.c.b16 %v721, %v719
    %v794 = vpack.c.b16 %v724, %v722
    %v795 = vpack.c.b16 %v725, %v723
    %v796 = vpack.c.b16 %v728, %v726
    %v797 = vpack.c.b16 %v729, %v727
    %v798 = vpack.c.b16 %v732, %v730
    %v799 = vpack.c.b16 %v733, %v731
    %v800 = vpack.c.b16 %v736, %v734
    %v801 = vpack.c.b16 %v737, %v735
    %866 = vmatprep.subr.bf16.mxu0 %v753
    %867 = vmatpush1.bf16.msra.mxu0 %v752
    %868 = vmatprep.subr.bf16.mxu0 %v751
    %869 = vmatpush1.bf16.msra.mxu0 %v750
    %870 = vmatprep.subr.bf16.mxu0 %v749
    %871 = vmatpush1.bf16.msra.mxu0 %v748
    %872 = vmatprep.subr.bf16.mxu0 %v747
    %873 = vmatpush1.bf16.msra.mxu0 %v746
    %874 = vmatprep.subr.bf16.mxu0 %v745
    %875 = vmatpush1.bf16.msra.mxu0 %v744
    %876 = vmatprep.subr.bf16.mxu0 %v743
    %877 = vmatpush1.bf16.msra.mxu0 %v742
    %878 = vmatprep.subr.bf16.mxu0 %v741
    %879 = vmatpush1.bf16.msra.mxu0 %v740
    %880 = vmatprep.subr.bf16.mxu0 %v739
    %881 = vmatpush1.bf16.msra.mxu0 %v738
    %882 = vmatprep.subr.bf16.mxu0 %v769
    %883 = vmatpush2.bf16.msra.mxu0 %v768
    %884 = vmatprep.subr.bf16.mxu0 %v767
    %885 = vmatpush2.bf16.msra.mxu0 %v766
    %886 = vmatprep.subr.bf16.mxu0 %v765
    %887 = vmatpush2.bf16.msra.mxu0 %v764
    %888 = vmatprep.subr.bf16.mxu0 %v763
    %889 = vmatpush2.bf16.msra.mxu0 %v762
    %890 = vmatprep.subr.bf16.mxu0 %v761
    %891 = vmatpush2.bf16.msra.mxu0 %v760
    %892 = vmatprep.subr.bf16.mxu0 %v759
    %893 = vmatpush2.bf16.msra.mxu0 %v758
    %894 = vmatprep.subr.bf16.mxu0 %v757
    %895 = vmatpush2.bf16.msra.mxu0 %v756
    %896 = vmatprep.subr.bf16.mxu0 %v755
    %897 = vmatpush2.bf16.msra.mxu0 %v754
    %898 = vmatprep.mubr.bf16.mxu0 %v479
    %899 = vmatmul.mubr.bf16.gmra.mxu0 %v478
    %v900 = vpop.f32.mrf.mxu0
    %v901 = vadd.f32 0.0, %v900
    %v902 = vpop.f32.mrf.mxu0
    %v903 = vadd.f32 0.0, %v902
    %v904 = vpop.f32.mrf.mxu0
    %v905 = vpop.f32.mrf.mxu0
    %906 = vdwg.mxu0
    %907 = vmatprep.subr.bf16.mxu0 %v785
    %908 = vmatpush1.bf16.msra.mxu0 %v784
    %909 = vmatprep.subr.bf16.mxu0 %v783
    %910 = vmatpush1.bf16.msra.mxu0 %v782
    %911 = vmatprep.subr.bf16.mxu0 %v781
    %912 = vmatpush1.bf16.msra.mxu0 %v780
    %913 = vmatprep.subr.bf16.mxu0 %v779
    %914 = vmatpush1.bf16.msra.mxu0 %v778
    %915 = vmatprep.subr.bf16.mxu0 %v777
    %916 = vmatpush1.bf16.msra.mxu0 %v776
    %917 = vmatprep.subr.bf16.mxu0 %v775
    %918 = vmatpush1.bf16.msra.mxu0 %v774
    %919 = vmatprep.subr.bf16.mxu0 %v773
    %920 = vmatpush1.bf16.msra.mxu0 %v772
    %921 = vmatprep.subr.bf16.mxu0 %v771
    %922 = vmatpush1.bf16.msra.mxu0 %v770
    %923 = vmatprep.subr.bf16.mxu0 %v801
    %924 = vmatpush2.bf16.msra.mxu0 %v800
    %925 = vmatprep.subr.bf16.mxu0 %v799
    %926 = vmatpush2.bf16.msra.mxu0 %v798
    %927 = vmatprep.subr.bf16.mxu0 %v797
    %928 = vmatpush2.bf16.msra.mxu0 %v796
    %929 = vmatprep.subr.bf16.mxu0 %v795
    %930 = vmatpush2.bf16.msra.mxu0 %v794
    %931 = vmatprep.subr.bf16.mxu0 %v793
    %932 = vmatpush2.bf16.msra.mxu0 %v792
    %933 = vmatprep.subr.bf16.mxu0 %v791
    %934 = vmatpush2.bf16.msra.mxu0 %v790
    %935 = vmatprep.subr.bf16.mxu0 %v789
    %936 = vmatpush2.bf16.msra.mxu0 %v788
    %937 = vmatprep.subr.bf16.mxu0 %v787
    %938 = vmatpush2.bf16.msra.mxu0 %v786
    %939 = vmatprep.mubr.bf16.mxu0 %v481
    %940 = vmatmul.mubr.bf16.gmra.mxu0 %v480
    %v941 = vpop.f32.mrf.mxu0
    %v942 = vadd.f32 %v901, %v941
    %v943 = vpop.f32.mrf.mxu0
    %v944 = vadd.f32 %v903, %v943
    %v945 = vpop.f32.mrf.mxu0
    %v946 = vpop.f32.mrf.mxu0
    %947 = vdwg.mxu0
    %v948 = vadd.f32 %v942, %v944
    %949 = vadd.xlane.f32.xlu0 %v948
    %v950 = vpop.xlane.xlu0 %949
    %v951 = vrcp.pop 256.0
    %v952 = vmul.f32 %v950, %v951
    %v953 = vsub.f32 %v942, %v952
    %v954 = vsub.f32 %v944, %v952
    %v955 = vmul.f32 %v953, %v953
    %v956 = vmul.f32 %v954, %v954
    %v957 = vadd.f32 %v955, %v956
    %958 = vadd.xlane.f32.xlu0 %v957
    %v959 = vpop.xlane.xlu0 %958
    %v960 = vmul.f32 %v959, %v951
    %v961 = vadd.f32 %v960, 1e-05
    %v962 = vrsqrt.pop %v961
    %v963 = vmul.f32 %v953, %v962
    %v964 = vmul.f32 %v954, %v962
    %v965 = vmax.f32 %v963, 0.0
    %v966 = vmax.f32 %v964, 0.0
    %v967 = vpack.c.bf16 %v965, %v965
    %v968 = vpack.c.bf16 %v966, %v966
    %v969 = vld [vmem:[#allocation5] sm:$0xff]
    %v970 = vld [vmem:[#allocation5 + $0x8] sm:$0xff]
    %v971 = vld [vmem:[#allocation5 + $0x10] sm:$0xff]
    %v972 = vld [vmem:[#allocation5 + $0x18] sm:$0xff]
    %v973 = vld [vmem:[#allocation5 + $0x20] sm:$0xff]
    %v974 = vld [vmem:[#allocation5 + $0x28] sm:$0xff]
    %v975 = vld [vmem:[#allocation5 + $0x30] sm:$0xff]
    %v976 = vld [vmem:[#allocation5 + $0x38] sm:$0xff]
    %v977 = vld [vmem:[#allocation5 + $0x40] sm:$0xff]
    %v978 = vld [vmem:[#allocation5 + $0x48] sm:$0xff]
    %v979 = vld [vmem:[#allocation5 + $0x50] sm:$0xff]
    %v980 = vld [vmem:[#allocation5 + $0x58] sm:$0xff]
    %v981 = vld [vmem:[#allocation5 + $0x60] sm:$0xff]
    %v982 = vld [vmem:[#allocation5 + $0x68] sm:$0xff]
    %v983 = vld [vmem:[#allocation5 + $0x70] sm:$0xff]
    %v984 = vld [vmem:[#allocation5 + $0x78] sm:$0xff]
    %v985 = vld [vmem:[#allocation5 + $0x80] sm:$0xff]
    %v986 = vld [vmem:[#allocation5 + $0x88] sm:$0xff]
    %v987 = vld [vmem:[#allocation5 + $0x90] sm:$0xff]
    %v988 = vld [vmem:[#allocation5 + $0x98] sm:$0xff]
    %v989 = vld [vmem:[#allocation5 + $0xa0] sm:$0xff]
    %v990 = vld [vmem:[#allocation5 + $0xa8] sm:$0xff]
    %v991 = vld [vmem:[#allocation5 + $0xb0] sm:$0xff]
    %v992 = vld [vmem:[#allocation5 + $0xb8] sm:$0xff]
    %v993 = vld [vmem:[#allocation5 + $0xc0] sm:$0xff]
    %v994 = vld [vmem:[#allocation5 + $0xc8] sm:$0xff]
    %v995 = vld [vmem:[#allocation5 + $0xd0] sm:$0xff]
    %v996 = vld [vmem:[#allocation5 + $0xd8] sm:$0xff]
    %v997 = vld [vmem:[#allocation5 + $0xe0] sm:$0xff]
    %v998 = vld [vmem:[#allocation5 + $0xe8] sm:$0xff]
    %v999 = vld [vmem:[#allocation5 + $0xf0] sm:$0xff]
    %v1000 = vld [vmem:[#allocation5 + $0xf8] sm:$0xff]
    %v1033 = vunpack.c.l.b16 %v969
    %v1034 = vunpack.c.h.b16 %v969
    %v1035 = vunpack.c.l.b16 %v970
    %v1036 = vunpack.c.h.b16 %v970
    %v1037 = vunpack.c.l.b16 %v971
    %v1038 = vunpack.c.h.b16 %v971
    %v1039 = vunpack.c.l.b16 %v972
    %v1040 = vunpack.c.h.b16 %v972
    %v1041 = vunpack.c.l.b16 %v973
    %v1042 = vunpack.c.h.b16 %v973
    %v1043 = vunpack.c.l.b16 %v974
    %v1044 = vunpack.c.h.b16 %v974
    %v1045 = vunpack.c.l.b16 %v975
    %v1046 = vunpack.c.h.b16 %v975
    %v1047 = vunpack.c.l.b16 %v976
    %v1048 = vunpack.c.h.b16 %v976
    %v1049 = vunpack.c.l.b16 %v977
    %v1050 = vunpack.c.h.b16 %v977
    %v1051 = vunpack.c.l.b16 %v978
    %v1052 = vunpack.c.h.b16 %v978
    %v1053 = vunpack.c.l.b16 %v979
    %v1054 = vunpack.c.h.b16 %v979
    %v1055 = vunpack.c.l.b16 %v980
    %v1056 = vunpack.c.h.b16 %v980
    %v1057 = vunpack.c.l.b16 %v981
    %v1058 = vunpack.c.h.b16 %v981
    %v1059 = vunpack.c.l.b16 %v982
    %v1060 = vunpack.c.h.b16 %v982
    %v1061 = vunpack.c.l.b16 %v983
    %v1062 = vunpack.c.h.b16 %v983
    %v1063 = vunpack.c.l.b16 %v984
    %v1064 = vunpack.c.h.b16 %v984
    %v1065 = vunpack.c.l.b16 %v985
    %v1066 = vunpack.c.h.b16 %v985
    %v1067 = vunpack.c.l.b16 %v986
    %v1068 = vunpack.c.h.b16 %v986
    %v1069 = vunpack.c.l.b16 %v987
    %v1070 = vunpack.c.h.b16 %v987
    %v1071 = vunpack.c.l.b16 %v988
    %v1072 = vunpack.c.h.b16 %v988
    %v1073 = vunpack.c.l.b16 %v989
    %v1074 = vunpack.c.h.b16 %v989
    %v1075 = vunpack.c.l.b16 %v990
    %v1076 = vunpack.c.h.b16 %v990
    %v1077 = vunpack.c.l.b16 %v991
    %v1078 = vunpack.c.h.b16 %v991
    %v1079 = vunpack.c.l.b16 %v992
    %v1080 = vunpack.c.h.b16 %v992
    %v1081 = vunpack.c.l.b16 %v993
    %v1082 = vunpack.c.h.b16 %v993
    %v1083 = vunpack.c.l.b16 %v994
    %v1084 = vunpack.c.h.b16 %v994
    %v1085 = vunpack.c.l.b16 %v995
    %v1086 = vunpack.c.h.b16 %v995
    %v1087 = vunpack.c.l.b16 %v996
    %v1088 = vunpack.c.h.b16 %v996
    %v1089 = vunpack.c.l.b16 %v997
    %v1090 = vunpack.c.h.b16 %v997
    %v1091 = vunpack.c.l.b16 %v998
    %v1092 = vunpack.c.h.b16 %v998
    %v1093 = vunpack.c.l.b16 %v999
    %v1094 = vunpack.c.h.b16 %v999
    %v1095 = vunpack.c.l.b16 %v1000
    %v1096 = vunpack.c.h.b16 %v1000
    %v1097 = vpack.c.b16 %v1035, %v1033
    %v1098 = vpack.c.b16 %v1036, %v1034
    %v1099 = vpack.c.b16 %v1039, %v1037
    %v1100 = vpack.c.b16 %v1040, %v1038
    %v1101 = vpack.c.b16 %v1043, %v1041
    %v1102 = vpack.c.b16 %v1044, %v1042
    %v1103 = vpack.c.b16 %v1047, %v1045
    %v1104 = vpack.c.b16 %v1048, %v1046
    %v1105 = vpack.c.b16 %v1051, %v1049
    %v1106 = vpack.c.b16 %v1052, %v1050
    %v1107 = vpack.c.b16 %v1055, %v1053
    %v1108 = vpack.c.b16 %v1056, %v1054
    %v1109 = vpack.c.b16 %v1059, %v1057
    %v1110 = vpack.c.b16 %v1060, %v1058
    %v1111 = vpack.c.b16 %v1063, %v1061
    %v1112 = vpack.c.b16 %v1064, %v1062
    %v1113 = vpack.c.b16 %v1067, %v1065
    %v1114 = vpack.c.b16 %v1068, %v1066
    %v1115 = vpack.c.b16 %v1071, %v1069
    %v1116 = vpack.c.b16 %v1072, %v1070
    %v1117 = vpack.c.b16 %v1075, %v1073
    %v1118 = vpack.c.b16 %v1076, %v1074
    %v1119 = vpack.c.b16 %v1079, %v1077
    %v1120 = vpack.c.b16 %v1080, %v1078
    %v1121 = vpack.c.b16 %v1083, %v1081
    %v1122 = vpack.c.b16 %v1084, %v1082
    %v1123 = vpack.c.b16 %v1087, %v1085
    %v1124 = vpack.c.b16 %v1088, %v1086
    %v1125 = vpack.c.b16 %v1091, %v1089
    %v1126 = vpack.c.b16 %v1092, %v1090
    %v1127 = vpack.c.b16 %v1095, %v1093
    %v1128 = vpack.c.b16 %v1096, %v1094
    %1161 = vmatprep.subr.bf16.mxu0 %v1112
    %1162 = vmatpush1.bf16.msra.mxu0 %v1111
    %1163 = vmatprep.subr.bf16.mxu0 %v1110
    %1164 = vmatpush1.bf16.msra.mxu0 %v1109
    %1165 = vmatprep.subr.bf16.mxu0 %v1108
    %1166 = vmatpush1.bf16.msra.mxu0 %v1107
    %1167 = vmatprep.subr.bf16.mxu0 %v1106
    %1168 = vmatpush1.bf16.msra.mxu0 %v1105
    %1169 = vmatprep.subr.bf16.mxu0 %v1104
    %1170 = vmatpush1.bf16.msra.mxu0 %v1103
    %1171 = vmatprep.subr.bf16.mxu0 %v1102
    %1172 = vmatpush1.bf16.msra.mxu0 %v1101
    %1173 = vmatprep.subr.bf16.mxu0 %v1100
    %1174 = vmatpush1.bf16.msra.mxu0 %v1099
    %1175 = vmatprep.subr.bf16.mxu0 %v1098
    %1176 = vmatpush1.bf16.msra.mxu0 %v1097
    %1177 = vmatprep.subr.bf16.mxu0 %v1128
    %1178 = vmatpush2.bf16.msra.mxu0 %v1127
    %1179 = vmatprep.subr.bf16.mxu0 %v1126
    %1180 = vmatpush2.bf16.msra.mxu0 %v1125
    %1181 = vmatprep.subr.bf16.mxu0 %v1124
    %1182 = vmatpush2.bf16.msra.mxu0 %v1123
    %1183 = vmatprep.subr.bf16.mxu0 %v1122
    %1184 = vmatpush2.bf16.msra.mxu0 %v1121
    %1185 = vmatprep.subr.bf16.mxu0 %v1120
    %1186 = vmatpush2.bf16.msra.mxu0 %v1119
    %1187 = vmatprep.subr.bf16.mxu0 %v1118
    %1188 = vmatpush2.bf16.msra.mxu0 %v1117
    %1189 = vmatprep.subr.bf16.mxu0 %v1116
    %1190 = vmatpush2.bf16.msra.mxu0 %v1115
    %1191 = vmatprep.subr.bf16.mxu0 %v1114
    %1192 = vmatpush2.bf16.msra.mxu0 %v1113
    %1193 = vmatprep.mubr.bf16.mxu0 %v968
    %1194 = vmatmul.mubr.bf16.gmra.mxu0 %v967
    %v1195 = vpop.f32.mrf.mxu0
    %v1196 = vadd.f32 0.0, %v1195
    %v1197 = vpop.f32.mrf.mxu0
    %v1198 = vadd.f32 0.0, %v1197
    %v1199 = vpop.f32.mrf.mxu0
    %v1200 = vpop.f32.mrf.mxu0
    %1201 = vdwg.mxu0
    %v1202 = vadd.f32 %v1196, %v1198
    %1203 = vadd.xlane.f32.xlu0 %v1202
    %v1204 = vpop.xlane.xlu0 %1203
    %v1205 = vmul.f32 %v1204, %v951
    %v1206 = vsub.f32 %v1196, %v1205
    %v1207 = vsub.f32 %v1198, %v1205
    %v1208 = vmul.f32 %v1206, %v1206
    %v1209 = vmul.f32 %v1207, %v1207
    %v1210 = vadd.f32 %v1208, %v1209
    %1211 = vadd.xlane.f32.xlu0 %v1210
    %v1212 = vpop.xlane.xlu0 %1211
    %v1213 = vmul.f32 %v1212, %v951
    %v1214 = vadd.f32 %v1213, 1e-05
    %v1215 = vrsqrt.pop %v1214
    %v1216 = vmul.f32 %v1206, %v1215
    %v1217 = vmul.f32 %v1207, %v1215
    %v1218 = vmax.f32 %v1216, 0.0
    %v1219 = vmax.f32 %v1217, 0.0
    %v1220 = vpack.c.bf16 %v1218, %v1218
    %v1221 = vpack.c.bf16 %v1219, %v1219
    %v1222 = vld [vmem:[%s4] sm:$0xff]
    %v1223 = vld [vmem:[%s4 + $0x8] sm:$0xff]
    %v1224 = vld [vmem:[%s4 + $0x10] sm:$0xff]
    %v1225 = vld [vmem:[%s4 + $0x18] sm:$0xff]
    %v1226 = vld [vmem:[%s4 + $0x20] sm:$0xff]
    %v1227 = vld [vmem:[%s4 + $0x28] sm:$0xff]
    %v1228 = vld [vmem:[%s4 + $0x30] sm:$0xff]
    %v1229 = vld [vmem:[%s4 + $0x38] sm:$0xff]
    %v1230 = vld [vmem:[%s4 + $0x40] sm:$0xff]
    %v1231 = vld [vmem:[%s4 + $0x48] sm:$0xff]
    %v1232 = vld [vmem:[%s4 + $0x50] sm:$0xff]
    %v1233 = vld [vmem:[%s4 + $0x58] sm:$0xff]
    %v1234 = vld [vmem:[%s4 + $0x60] sm:$0xff]
    %v1235 = vld [vmem:[%s4 + $0x68] sm:$0xff]
    %v1236 = vld [vmem:[%s4 + $0x70] sm:$0xff]
    %v1237 = vld [vmem:[%s4 + $0x78] sm:$0xff]
    %v1238 = vld [vmem:[%s4 + $0x80] sm:$0xff]
    %v1239 = vld [vmem:[%s4 + $0x88] sm:$0xff]
    %v1240 = vld [vmem:[%s4 + $0x90] sm:$0xff]
    %v1241 = vld [vmem:[%s4 + $0x98] sm:$0xff]
    %v1242 = vld [vmem:[%s4 + $0xa0] sm:$0xff]
    %v1243 = vld [vmem:[%s4 + $0xa8] sm:$0xff]
    %v1244 = vld [vmem:[%s4 + $0xb0] sm:$0xff]
    %v1245 = vld [vmem:[%s4 + $0xb8] sm:$0xff]
    %v1246 = vld [vmem:[%s4 + $0xc0] sm:$0xff]
    %v1247 = vld [vmem:[%s4 + $0xc8] sm:$0xff]
    %v1248 = vld [vmem:[%s4 + $0xd0] sm:$0xff]
    %v1249 = vld [vmem:[%s4 + $0xd8] sm:$0xff]
    %v1250 = vld [vmem:[%s4 + $0xe0] sm:$0xff]
    %v1251 = vld [vmem:[%s4 + $0xe8] sm:$0xff]
    %v1252 = vld [vmem:[%s4 + $0xf0] sm:$0xff]
    %v1253 = vld [vmem:[%s4 + $0xf8] sm:$0xff]
    %v1286 = vunpack.c.l.b16 %v1222
    %v1287 = vunpack.c.h.b16 %v1222
    %v1288 = vunpack.c.l.b16 %v1223
    %v1289 = vunpack.c.h.b16 %v1223
    %v1290 = vunpack.c.l.b16 %v1224
    %v1291 = vunpack.c.h.b16 %v1224
    %v1292 = vunpack.c.l.b16 %v1225
    %v1293 = vunpack.c.h.b16 %v1225
    %v1294 = vunpack.c.l.b16 %v1226
    %v1295 = vunpack.c.h.b16 %v1226
    %v1296 = vunpack.c.l.b16 %v1227
    %v1297 = vunpack.c.h.b16 %v1227
    %v1298 = vunpack.c.l.b16 %v1228
    %v1299 = vunpack.c.h.b16 %v1228
    %v1300 = vunpack.c.l.b16 %v1229
    %v1301 = vunpack.c.h.b16 %v1229
    %v1302 = vunpack.c.l.b16 %v1230
    %v1303 = vunpack.c.h.b16 %v1230
    %v1304 = vunpack.c.l.b16 %v1231
    %v1305 = vunpack.c.h.b16 %v1231
    %v1306 = vunpack.c.l.b16 %v1232
    %v1307 = vunpack.c.h.b16 %v1232
    %v1308 = vunpack.c.l.b16 %v1233
    %v1309 = vunpack.c.h.b16 %v1233
    %v1310 = vunpack.c.l.b16 %v1234
    %v1311 = vunpack.c.h.b16 %v1234
    %v1312 = vunpack.c.l.b16 %v1235
    %v1313 = vunpack.c.h.b16 %v1235
    %v1314 = vunpack.c.l.b16 %v1236
    %v1315 = vunpack.c.h.b16 %v1236
    %v1316 = vunpack.c.l.b16 %v1237
    %v1317 = vunpack.c.h.b16 %v1237
    %v1318 = vunpack.c.l.b16 %v1238
    %v1319 = vunpack.c.h.b16 %v1238
    %v1320 = vunpack.c.l.b16 %v1239
    %v1321 = vunpack.c.h.b16 %v1239
    %v1322 = vunpack.c.l.b16 %v1240
    %v1323 = vunpack.c.h.b16 %v1240
    %v1324 = vunpack.c.l.b16 %v1241
    %v1325 = vunpack.c.h.b16 %v1241
    %v1326 = vunpack.c.l.b16 %v1242
    %v1327 = vunpack.c.h.b16 %v1242
    %v1328 = vunpack.c.l.b16 %v1243
    %v1329 = vunpack.c.h.b16 %v1243
    %v1330 = vunpack.c.l.b16 %v1244
    %v1331 = vunpack.c.h.b16 %v1244
    %v1332 = vunpack.c.l.b16 %v1245
    %v1333 = vunpack.c.h.b16 %v1245
    %v1334 = vunpack.c.l.b16 %v1246
    %v1335 = vunpack.c.h.b16 %v1246
    %v1336 = vunpack.c.l.b16 %v1247
    %v1337 = vunpack.c.h.b16 %v1247
    %v1338 = vunpack.c.l.b16 %v1248
    %v1339 = vunpack.c.h.b16 %v1248
    %v1340 = vunpack.c.l.b16 %v1249
    %v1341 = vunpack.c.h.b16 %v1249
    %v1342 = vunpack.c.l.b16 %v1250
    %v1343 = vunpack.c.h.b16 %v1250
    %v1344 = vunpack.c.l.b16 %v1251
    %v1345 = vunpack.c.h.b16 %v1251
    %v1346 = vunpack.c.l.b16 %v1252
    %v1347 = vunpack.c.h.b16 %v1252
    %v1348 = vunpack.c.l.b16 %v1253
    %v1349 = vunpack.c.h.b16 %v1253
    %v1350 = vpack.c.b16 %v1288, %v1286
    %v1351 = vpack.c.b16 %v1289, %v1287
    %v1352 = vpack.c.b16 %v1292, %v1290
    %v1353 = vpack.c.b16 %v1293, %v1291
    %v1354 = vpack.c.b16 %v1296, %v1294
    %v1355 = vpack.c.b16 %v1297, %v1295
    %v1356 = vpack.c.b16 %v1300, %v1298
    %v1357 = vpack.c.b16 %v1301, %v1299
    %v1358 = vpack.c.b16 %v1304, %v1302
    %v1359 = vpack.c.b16 %v1305, %v1303
    %v1360 = vpack.c.b16 %v1308, %v1306
    %v1361 = vpack.c.b16 %v1309, %v1307
    %v1362 = vpack.c.b16 %v1312, %v1310
    %v1363 = vpack.c.b16 %v1313, %v1311
    %v1364 = vpack.c.b16 %v1316, %v1314
    %v1365 = vpack.c.b16 %v1317, %v1315
    %v1366 = vpack.c.b16 %v1320, %v1318
    %v1367 = vpack.c.b16 %v1321, %v1319
    %v1368 = vpack.c.b16 %v1324, %v1322
    %v1369 = vpack.c.b16 %v1325, %v1323
    %v1370 = vpack.c.b16 %v1328, %v1326
    %v1371 = vpack.c.b16 %v1329, %v1327
    %v1372 = vpack.c.b16 %v1332, %v1330
    %v1373 = vpack.c.b16 %v1333, %v1331
    %v1374 = vpack.c.b16 %v1336, %v1334
    %v1375 = vpack.c.b16 %v1337, %v1335
    %v1376 = vpack.c.b16 %v1340, %v1338
    %v1377 = vpack.c.b16 %v1341, %v1339
    %v1378 = vpack.c.b16 %v1344, %v1342
    %v1379 = vpack.c.b16 %v1345, %v1343
    %v1380 = vpack.c.b16 %v1348, %v1346
    %v1381 = vpack.c.b16 %v1349, %v1347
    %1414 = vmatprep.subr.bf16.mxu0 %v1365
    %1415 = vmatpush1.bf16.msra.mxu0 %v1364
    %1416 = vmatprep.subr.bf16.mxu0 %v1363
    %1417 = vmatpush1.bf16.msra.mxu0 %v1362
    %1418 = vmatprep.subr.bf16.mxu0 %v1361
    %1419 = vmatpush1.bf16.msra.mxu0 %v1360
    %1420 = vmatprep.subr.bf16.mxu0 %v1359
    %1421 = vmatpush1.bf16.msra.mxu0 %v1358
    %1422 = vmatprep.subr.bf16.mxu0 %v1357
    %1423 = vmatpush1.bf16.msra.mxu0 %v1356
    %1424 = vmatprep.subr.bf16.mxu0 %v1355
    %1425 = vmatpush1.bf16.msra.mxu0 %v1354
    %1426 = vmatprep.subr.bf16.mxu0 %v1353
    %1427 = vmatpush1.bf16.msra.mxu0 %v1352
    %1428 = vmatprep.subr.bf16.mxu0 %v1351
    %1429 = vmatpush1.bf16.msra.mxu0 %v1350
    %1430 = vmatprep.subr.bf16.mxu0 %v1381
    %1431 = vmatpush2.bf16.msra.mxu0 %v1380
    %1432 = vmatprep.subr.bf16.mxu0 %v1379
    %1433 = vmatpush2.bf16.msra.mxu0 %v1378
    %1434 = vmatprep.subr.bf16.mxu0 %v1377
    %1435 = vmatpush2.bf16.msra.mxu0 %v1376
    %1436 = vmatprep.subr.bf16.mxu0 %v1375
    %1437 = vmatpush2.bf16.msra.mxu0 %v1374
    %1438 = vmatprep.subr.bf16.mxu0 %v1373
    %1439 = vmatpush2.bf16.msra.mxu0 %v1372
    %1440 = vmatprep.subr.bf16.mxu0 %v1371
    %1441 = vmatpush2.bf16.msra.mxu0 %v1370
    %1442 = vmatprep.subr.bf16.mxu0 %v1369
    %1443 = vmatpush2.bf16.msra.mxu0 %v1368
    %1444 = vmatprep.subr.bf16.mxu0 %v1367
    %1445 = vmatpush2.bf16.msra.mxu0 %v1366
    %1446 = vmatprep.mubr.bf16.mxu0 %v1221
    %1447 = vmatmul.mubr.bf16.gmra.mxu0 %v1220
    %v1448 = vpop.f32.mrf.mxu0
    %v1449 = vadd.f32 0.0, %v1448
    %v1450 = vpop.f32.mrf.mxu0
    %v1451 = vadd.f32 0.0, %v1450
    %v1452 = vpop.f32.mrf.mxu0
    %v1453 = vpop.f32.mrf.mxu0
    %1454 = vdwg.mxu0
    %v1455 = vpack.c.bf16 %v1449, %v1449
    %v1456 = vpack.c.bf16 %v1451, %v1451
    %v1457 = vld [vmem:[#allocation7] sm:$0xf]
    %v1458 = vld [vmem:[#allocation7 + $0x4] sm:$0xf]
    %v1459 = vld [vmem:[#allocation7 + $0x8] sm:$0xf]
    %v1460 = vld [vmem:[#allocation7 + $0xc] sm:$0xf]
    %v1461 = vld [vmem:[#allocation7 + $0x10] sm:$0xf]
    %v1462 = vld [vmem:[#allocation7 + $0x14] sm:$0xf]
    %v1463 = vld [vmem:[#allocation7 + $0x18] sm:$0xf]
    %v1464 = vld [vmem:[#allocation7 + $0x1c] sm:$0xf]
    %v1465 = vld [vmem:[#allocation7 + $0x20] sm:$0xf]
    %v1466 = vld [vmem:[#allocation7 + $0x24] sm:$0xf]
    %v1467 = vld [vmem:[#allocation7 + $0x28] sm:$0xf]
    %v1468 = vld [vmem:[#allocation7 + $0x2c] sm:$0xf]
    %v1469 = vld [vmem:[#allocation7 + $0x30] sm:$0xf]
    %v1470 = vld [vmem:[#allocation7 + $0x34] sm:$0xf]
    %v1471 = vld [vmem:[#allocation7 + $0x38] sm:$0xf]
    %v1472 = vld [vmem:[#allocation7 + $0x3c] sm:$0xf]
    %v1473 = vld [vmem:[#allocation7 + $0x40] sm:$0xf]
    %v1474 = vld [vmem:[#allocation7 + $0x44] sm:$0xf]
    %v1475 = vld [vmem:[#allocation7 + $0x48] sm:$0xf]
    %v1476 = vld [vmem:[#allocation7 + $0x4c] sm:$0xf]
    %v1477 = vld [vmem:[#allocation7 + $0x50] sm:$0xf]
    %v1478 = vld [vmem:[#allocation7 + $0x54] sm:$0xf]
    %v1479 = vld [vmem:[#allocation7 + $0x58] sm:$0xf]
    %v1480 = vld [vmem:[#allocation7 + $0x5c] sm:$0xf]
    %v1505 = vunpack.c.l.b16 %v1457
    %v1506 = vunpack.c.l.b16 %v1458
    %v1507 = vunpack.c.l.b16 %v1459
    %v1508 = vunpack.c.l.b16 %v1460
    %v1509 = vunpack.c.l.b16 %v1461
    %v1510 = vunpack.c.l.b16 %v1462
    %v1511 = vunpack.c.l.b16 %v1463
    %v1512 = vunpack.c.l.b16 %v1464
    %v1513 = vunpack.c.l.b16 %v1465
    %v1514 = vunpack.c.l.b16 %v1466
    %v1515 = vunpack.c.l.b16 %v1467
    %v1516 = vunpack.c.l.b16 %v1468
    %v1517 = vunpack.c.l.b16 %v1469
    %v1518 = vunpack.c.l.b16 %v1470
    %v1519 = vunpack.c.l.b16 %v1471
    %v1520 = vunpack.c.l.b16 %v1472
    %v1521 = vunpack.c.l.b16 %v1473
    %v1522 = vunpack.c.l.b16 %v1474
    %v1523 = vunpack.c.l.b16 %v1475
    %v1524 = vunpack.c.l.b16 %v1476
    %v1525 = vunpack.c.l.b16 %v1477
    %v1526 = vunpack.c.l.b16 %v1478
    %v1527 = vunpack.c.l.b16 %v1479
    %v1528 = vunpack.c.l.b16 %v1480
    %v1529 = vpack.c.b16 %v1506, %v1505
    %v1530 = vpack.c.b16 %v1508, %v1507
    %v1531 = vpack.c.b16 %v1510, %v1509
    %v1532 = vpack.c.b16 %v1512, %v1511
    %v1533 = vpack.c.b16 %v1514, %v1513
    %v1534 = vpack.c.b16 %v1516, %v1515
    %v1535 = vpack.c.b16 %v1518, %v1517
    %v1536 = vpack.c.b16 %v1520, %v1519
    %v1537 = vpack.c.b16 %v1522, %v1521
    %v1538 = vpack.c.b16 %v1524, %v1523
    %v1539 = vpack.c.b16 %v1526, %v1525
    %v1540 = vpack.c.b16 %v1528, %v1527
    %v1554 = vsel %vm361, %v1456, 0
    %1556 = vmatprep.subr.bf16.mxu0 0
    %1557 = vmatpush1.bf16.msra.mxu0 %v1536
    %1558 = vmatprep.subr.bf16.mxu0 0
    %1559 = vmatpush1.bf16.msra.mxu0 %v1535
    %1560 = vmatprep.subr.bf16.mxu0 0
    %1561 = vmatpush1.bf16.msra.mxu0 %v1534
    %1562 = vmatprep.subr.bf16.mxu0 0
    %1563 = vmatpush1.bf16.msra.mxu0 %v1533
    %1564 = vmatprep.subr.bf16.mxu0 0
    %1565 = vmatpush1.bf16.msra.mxu0 %v1532
    %1566 = vmatprep.subr.bf16.mxu0 0
    %1567 = vmatpush1.bf16.msra.mxu0 %v1531
    %1568 = vmatprep.subr.bf16.mxu0 0
    %1569 = vmatpush1.bf16.msra.mxu0 %v1530
    %1570 = vmatprep.subr.bf16.mxu0 0
    %1571 = vmatpush1.bf16.msra.mxu0 %v1529
    %1572 = vmatprep.subr.bf16.mxu0 0
    %1573 = vmatpush2.bf16.msra.mxu0 0
    %1574 = vmatprep.subr.bf16.mxu0 0
    %1575 = vmatpush2.bf16.msra.mxu0 0
    %1576 = vmatprep.subr.bf16.mxu0 0
    %1577 = vmatpush2.bf16.msra.mxu0 0
    %1578 = vmatprep.subr.bf16.mxu0 0
    %1579 = vmatpush2.bf16.msra.mxu0 0
    %1580 = vmatprep.subr.bf16.mxu0 0
    %1581 = vmatpush2.bf16.msra.mxu0 %v1540
    %1582 = vmatprep.subr.bf16.mxu0 0
    %1583 = vmatpush2.bf16.msra.mxu0 %v1539
    %1584 = vmatprep.subr.bf16.mxu0 0
    %1585 = vmatpush2.bf16.msra.mxu0 %v1538
    %1586 = vmatprep.subr.bf16.mxu0 0
    %1587 = vmatpush2.bf16.msra.mxu0 %v1537
    %1588 = vmatprep.mubr.bf16.mxu0 %v1554
    %1589 = vmatmul.mubr.bf16.gmra.mxu0 %v1455
    %v1590 = vpop.f32.mrf.mxu0
    %v1591 = vadd.f32 0.0, %v1590
    %v1592 = vpop.f32.mrf.mxu0
    %v1593 = vpop.f32.mrf.mxu0
    %v1594 = vpop.f32.mrf.mxu0
    %1595 = vdwg.mxu0
    %1596 = vst [vmem:[#allocation8] sm:$0xff] %v1591
    // Predicated region
    $region38: #{tpu_custom_call.1} parent=1 // pred_check
      _
    $region39: #{tpu_custom_call.1} parent=1 // pred_check_branch
      %1598 = sbr.rel (0) target = $region41
    $region40: #{tpu_custom_call.1} parent=1 // pred_region
      %s1600 = ssub.s32 128, 128
      %1601 = vsyncadd [#allocation4], %s1600
      %s1603 = sshll.u32 [#allocation8], 4
      %s1604 = int_to_ptr.vmem [resolvable:$true] %s1603
      %1606 = dma.vmem_to_hbm [thread:$0]  %s1604, 128, %s6, [#allocation4]
    $region41: #{tpu_custom_call.1} parent=1 // pred_fallthru
      _
    // Predicated region
    $region42: #{tpu_custom_call.1} parent=1 // pred_check
      _
    $region43: #{tpu_custom_call.1} parent=1 // pred_check_branch
      %1608 = sbr.rel (0) target = $region45
    $region44: #{tpu_custom_call.1} parent=1 // pred_region
      %1609 = dma.done [#allocation4], 128
    $region45: #{tpu_custom_call.1} parent=1 // pred_fallthru
      _
    %1610 = vsyncpa [#allocation3], 1
    %1611 = vsyncpa [#allocation6], 1
    %1612 = vsyncpa [#allocation4], 1

</llo_original>
